<compile_context>
chip_gen: v7x
topology: tpu7x:2x2x1
jax: 0.10.0
libtpu: 0.0.40
codegen_flags: <defaults>
</compile_context>

<pallas_src>
import functools
import math

import jax
import jax.numpy as jnp
from jax.experimental import pallas as pl
from jax.experimental.pallas import tpu as pltpu


def _mha_kernel(q_ref, k_ref, v_ref,
                wq_ref, bq_ref, wk_ref, bk_ref, wv_ref, bv_ref,
                wo_ref, bo_ref,
                o_ref, *, h, d_k):
    # Per grid step (one batch element):
    #   q/k/v_ref : (1, S, D) bf16        wq/wk/wv_ref : (h, D, d_k) bf16
    #   bq/bk/bv_ref : (h, 1, d_k) f32    wo_ref : (h, d_k, D) bf16
    #   bo_ref : (1, D) f32               o_ref : (1, S, D) f32
    S = q_ref.shape[1]
    D = h * d_k
    scale = 1.0 / math.sqrt(d_k)
    f32 = jnp.float32
    bf16 = jnp.bfloat16

    def project(x_ref, w_ref, b_ref):
        # Head-batched projection: batch over heads, contract the model dim.
        # broadcast_to only adds a major (head) dim -- cheap, no lane relayout.
        xb = jnp.broadcast_to(x_ref[0], (h, S, D))                      # (h, S, D) bf16
        y = jnp.einsum("hsc,hcd->hsd", xb, w_ref[...],
                       preferred_element_type=f32)                      # f32 accumulate
        return y + b_ref[...]                                           # (h, S, d_k) f32

    # Fold 1/sqrt(d_k) into Q (small tensor) instead of the (h, S, S) scores.
    qh = (project(q_ref, wq_ref, bq_ref) * scale).astype(bf16)
    kh = project(k_ref, wk_ref, bk_ref).astype(bf16)
    vh = project(v_ref, wv_ref, bv_ref).astype(bf16)

    # Scores for all heads at once; both operands contract their minor d_k dim,
    # so no explicit K transpose is ever formed.
    scores = jnp.einsum("hqd,hkd->hqk", qh, kh, preferred_element_type=f32)  # (h, S, S)

    # Numerically stable softmax in f32; reciprocal runs on the EUP slot.
    scores = scores - jnp.max(scores, axis=-1, keepdims=True)
    p = jnp.exp(scores)
    p = p * pl.reciprocal(jnp.sum(p, axis=-1, keepdims=True), approx=True)

    # Per-head context, then output projection folded per head (no concat).
    ctx = jnp.einsum("hqk,hkd->hqd", p.astype(bf16), vh,
                     preferred_element_type=f32)                          # (h, S, d_k)
    per_head = jnp.einsum("hqd,hdo->hqo", ctx.astype(bf16), wo_ref[...],
                          preferred_element_type=f32)                     # (h, S, D)

    # Combine heads: static unroll of full-width major-axis picks + VALU adds
    # (these are NOT lane slices), single (S, D) store at the end.
    out = per_head[0] + bo_ref[...]
    for i in range(1, h):
        out = out + per_head[i]

    o_ref[0] = out.astype(o_ref.dtype)


def mha_forward(query, key, value, params, *, h):
    """query/key/value: (B, S, D) float32. params: dict of torch-convention weights."""
    B, S, D = query.shape
    assert D % h == 0
    d_k = D // h
    bf16 = jnp.bfloat16
    f32 = jnp.float32

    # --- wrapper-side weight packing (plain XLA glue, outside the kernel) ---
    # torch Linear: y = x @ W.T + b with W of shape (D_out, D_in).
    # wq_h[h, c, d] = wq[h*d_k + d, c]  so  qh = einsum('hsc,hcd->hsd', x, wq_h)
    # wo_h[h, d, o] = wo[o, h*d_k + d]  so  out = sum_h ctx_h @ wo_h[h]
    def qkv_w(w):
        return w.reshape(h, d_k, D).transpose(0, 2, 1).astype(bf16)     # (h, D, d_k)

    def qkv_b(b):
        return b.reshape(h, 1, d_k).astype(f32)                         # (h, 1, d_k)

    wq_h, wk_h, wv_h = qkv_w(params["wq"]), qkv_w(params["wk"]), qkv_w(params["wv"])
    bq_h, bk_h, bv_h = qkv_b(params["bq"]), qkv_b(params["bk"]), qkv_b(params["bv"])
    wo_h = params["wo"].T.reshape(h, d_k, D).astype(bf16)               # (h, d_k, D)
    bo = params["bo"].reshape(1, D).astype(f32)

    # bf16 activations: half the HBM->VMEM bytes; accumulation stays f32 in-kernel.
    q_b, k_b, v_b = (x.astype(bf16) for x in (query, key, value))

    seq_spec = pl.BlockSpec((1, S, D), lambda b: (b, 0, 0))
    wqkv_spec = pl.BlockSpec((h, D, d_k), lambda b: (0, 0, 0))
    bqkv_spec = pl.BlockSpec((h, 1, d_k), lambda b: (0, 0, 0))
    wo_spec = pl.BlockSpec((h, d_k, D), lambda b: (0, 0, 0))
    bo_spec = pl.BlockSpec((1, D), lambda b: (0, 0))

    kernel = functools.partial(_mha_kernel, h=h, d_k=d_k)

    return pl.pallas_call(
        kernel,
        out_shape=jax.ShapeDtypeStruct((B, S, D), query.dtype),
        grid_spec=pltpu.PrefetchScalarGridSpec(
            num_scalar_prefetch=0,
            grid=(B,),
            in_specs=[seq_spec, seq_spec, seq_spec,
                      wqkv_spec, bqkv_spec, wqkv_spec, bqkv_spec, wqkv_spec, bqkv_spec,
                      wo_spec, bo_spec],
            out_specs=seq_spec,
        ),
        compiler_params=pltpu.CompilerParams(
            dimension_semantics=("parallel",)),
    )(q_b, k_b, v_b, wq_h, bq_h, wk_h, bk_h, wv_h, bv_h, wo_h, bo)


def _reference(query, key, value, params, *, h):
    """Pure-JAX f32 reference mirroring the PyTorch forward (eval mode)."""
    B, S, D = query.shape
    d_k = D // h

    def lin(x, w, b):
        return x @ w.T + b

    q = lin(query, params["wq"], params["bq"]).reshape(B, S, h, d_k).transpose(0, 2, 1, 3)
    k = lin(key, params["wk"], params["bk"]).reshape(B, S, h, d_k).transpose(0, 2, 1, 3)
    v = lin(value, params["wv"], params["bv"]).reshape(B, S, h, d_k).transpose(0, 2, 1, 3)
    scores = jnp.einsum("bhqd,bhkd->bhqk", q, k) / math.sqrt(d_k)
    p = jax.nn.softmax(scores, axis=-1)
    x = jnp.einsum("bhqk,bhkd->bhqd", p, v).transpose(0, 2, 1, 3).reshape(B, S, D)
    return lin(x, params["wo"], params["bo"])


if __name__ == "__main__":
    B, S, D, H = 2, 8, 32, 4

    key0 = jax.random.PRNGKey(0)
    keys = jax.random.split(key0, 16)

    scale = 1.0 / math.sqrt(D)
    params = {
        "wq": jax.random.uniform(keys[0], (D, D), jnp.float32, -scale, scale),
        "bq": jax.random.uniform(keys[1], (D,), jnp.float32, -scale, scale),
        "wk": jax.random.uniform(keys[2], (D, D), jnp.float32, -scale, scale),
        "bk": jax.random.uniform(keys[3], (D,), jnp.float32, -scale, scale),
        "wv": jax.random.uniform(keys[4], (D, D), jnp.float32, -scale, scale),
        "bv": jax.random.uniform(keys[5], (D,), jnp.float32, -scale, scale),
        "wo": jax.random.uniform(keys[6], (D, D), jnp.float32, -scale, scale),
        "bo": jax.random.uniform(keys[7], (D,), jnp.float32, -scale, scale),
    }

    query = jax.random.normal(keys[8], (B, S, D), jnp.float32)
    kkey = jax.random.normal(keys[9], (B, S, D), jnp.float32)
    value = jax.random.normal(keys[10], (B, S, D), jnp.float32)

    out = mha_forward(query, kkey, value, params, h=H)
    out = jax.block_until_ready(out)

    ref = _reference(query, kkey, value, params, h=H)
    assert out.shape == (B, S, D)
    # bf16 matmul operands with f32 accumulation -> compare with bf16-appropriate tolerance.
    max_err = float(jnp.max(jnp.abs(out - ref)))
    assert max_err < 3e-2, f"mismatch vs JAX reference (max abs err = {max_err})"

    print("KERNEL_OK")
</pallas_src>

<mosaic_0001>
module attributes {stable_mosaic.version = 11 : i64} {
  func.func @_mha_kernel(%arg0: i32, %arg1: memref<1x8x32xbf16, #tpu.memory_space<vmem>>, %arg2: memref<1x8x32xbf16, #tpu.memory_space<vmem>>, %arg3: memref<1x8x32xbf16, #tpu.memory_space<vmem>>, %arg4: memref<4x32x8xbf16, #tpu.memory_space<vmem>>, %arg5: memref<4x1x8xf32, #tpu.memory_space<vmem>>, %arg6: memref<4x32x8xbf16, #tpu.memory_space<vmem>>, %arg7: memref<4x1x8xf32, #tpu.memory_space<vmem>>, %arg8: memref<4x32x8xbf16, #tpu.memory_space<vmem>>, %arg9: memref<4x1x8xf32, #tpu.memory_space<vmem>>, %arg10: memref<4x8x32xbf16, #tpu.memory_space<vmem>>, %arg11: memref<1x32xf32, #tpu.memory_space<vmem>>, %arg12: memref<1x8x32xf32, #tpu.memory_space<vmem>>) attributes {dimension_semantics = [#tpu.dimension_semantics<parallel>], iteration_bounds = array<i64: 2>, scalar_prefetch = 0 : i64, scratch_operands = 0 : i64, tpu.core_type = #tpu.core_type<tc>, window_params = [{transform_indices = @transform_0, window_bounds = array<i64: 1, 8, 32>}, {transform_indices = @transform_1, window_bounds = array<i64: 1, 8, 32>}, {transform_indices = @transform_2, window_bounds = array<i64: 1, 8, 32>}, {pipeline_mode = #tpu.pipeline_mode<synchronous>, transform_indices = @transform_3, window_bounds = array<i64: 4, 32, 8>}, {pipeline_mode = #tpu.pipeline_mode<synchronous>, transform_indices = @transform_4, window_bounds = array<i64: 4, 1, 8>}, {pipeline_mode = #tpu.pipeline_mode<synchronous>, transform_indices = @transform_5, window_bounds = array<i64: 4, 32, 8>}, {pipeline_mode = #tpu.pipeline_mode<synchronous>, transform_indices = @transform_6, window_bounds = array<i64: 4, 1, 8>}, {pipeline_mode = #tpu.pipeline_mode<synchronous>, transform_indices = @transform_7, window_bounds = array<i64: 4, 32, 8>}, {pipeline_mode = #tpu.pipeline_mode<synchronous>, transform_indices = @transform_8, window_bounds = array<i64: 4, 1, 8>}, {pipeline_mode = #tpu.pipeline_mode<synchronous>, transform_indices = @transform_9, window_bounds = array<i64: 4, 8, 32>}, {pipeline_mode = #tpu.pipeline_mode<synchronous>, transform_indices = @transform_10, window_bounds = array<i64: 1, 32>}, {transform_indices = @transform_11, window_bounds = array<i64: 1, 8, 32>}]} {
    %c0 = arith.constant 0 : index
    %c0_0 = arith.constant 0 : index
    %c0_1 = arith.constant 0 : index
    %0 = vector.load %arg1[%c0, %c0_0, %c0_1] : memref<1x8x32xbf16, #tpu.memory_space<vmem>>, vector<1x8x32xbf16>
    %1 = vector.shape_cast %0 : vector<1x8x32xbf16> to vector<8x32xbf16>
    %2 = vector.shape_cast %1 : vector<8x32xbf16> to vector<1x8x32xbf16>
    %3 = vector.broadcast %2 : vector<1x8x32xbf16> to vector<4x8x32xbf16>
    %c0_2 = arith.constant 0 : index
    %c0_3 = arith.constant 0 : index
    %c0_4 = arith.constant 0 : index
    %4 = vector.load %arg4[%c0_2, %c0_3, %c0_4] : memref<4x32x8xbf16, #tpu.memory_space<vmem>>, vector<4x32x8xbf16>
    "tpu.trace_start"() <{level = 10 : i32, message = "hsc,hcd->hsd"}> : () -> ()
    %cst = arith.constant dense<0.000000e+00> : vector<4x8x8xf32>
    %5 = tpu.matmul %3, %4, %cst {dimension_numbers = #tpu.dot_dimension_numbers<[2], [1], [1], [2], [0, 0, 0, 1, 1, 2], [0], [0]>} : vector<4x8x32xbf16>, vector<4x32x8xbf16>, vector<4x8x8xf32> -> vector<4x8x8xf32>
    "tpu.trace_stop"() : () -> ()
    %c0_5 = arith.constant 0 : index
    %c0_6 = arith.constant 0 : index
    %c0_7 = arith.constant 0 : index
    %6 = vector.load %arg5[%c0_5, %c0_6, %c0_7] : memref<4x1x8xf32, #tpu.memory_space<vmem>>, vector<4x1x8xf32>
    %7 = vector.broadcast %6 : vector<4x1x8xf32> to vector<4x8x8xf32>
    %8 = arith.addf %5, %7 : vector<4x8x8xf32>
    %cst_8 = arith.constant 0.353553385 : f32
    %9 = vector.broadcast %cst_8 : f32 to vector<4x8x8xf32>
    %10 = arith.mulf %8, %9 : vector<4x8x8xf32>
    %11 = arith.truncf %10 : vector<4x8x8xf32> to vector<4x8x8xbf16>
    %c0_9 = arith.constant 0 : index
    %c0_10 = arith.constant 0 : index
    %c0_11 = arith.constant 0 : index
    %12 = vector.load %arg2[%c0_9, %c0_10, %c0_11] : memref<1x8x32xbf16, #tpu.memory_space<vmem>>, vector<1x8x32xbf16>
    %13 = vector.shape_cast %12 : vector<1x8x32xbf16> to vector<8x32xbf16>
    %14 = vector.shape_cast %13 : vector<8x32xbf16> to vector<1x8x32xbf16>
    %15 = vector.broadcast %14 : vector<1x8x32xbf16> to vector<4x8x32xbf16>
    %c0_12 = arith.constant 0 : index
    %c0_13 = arith.constant 0 : index
    %c0_14 = arith.constant 0 : index
    %16 = vector.load %arg6[%c0_12, %c0_13, %c0_14] : memref<4x32x8xbf16, #tpu.memory_space<vmem>>, vector<4x32x8xbf16>
    "tpu.trace_start"() <{level = 10 : i32, message = "hsc,hcd->hsd"}> : () -> ()
    %cst_15 = arith.constant dense<0.000000e+00> : vector<4x8x8xf32>
    %17 = tpu.matmul %15, %16, %cst_15 {dimension_numbers = #tpu.dot_dimension_numbers<[2], [1], [1], [2], [0, 0, 0, 1, 1, 2], [0], [0]>} : vector<4x8x32xbf16>, vector<4x32x8xbf16>, vector<4x8x8xf32> -> vector<4x8x8xf32>
    "tpu.trace_stop"() : () -> ()
    %c0_16 = arith.constant 0 : index
    %c0_17 = arith.constant 0 : index
    %c0_18 = arith.constant 0 : index
    %18 = vector.load %arg7[%c0_16, %c0_17, %c0_18] : memref<4x1x8xf32, #tpu.memory_space<vmem>>, vector<4x1x8xf32>
    %19 = vector.broadcast %18 : vector<4x1x8xf32> to vector<4x8x8xf32>
    %20 = arith.addf %17, %19 : vector<4x8x8xf32>
    %21 = arith.truncf %20 : vector<4x8x8xf32> to vector<4x8x8xbf16>
    %c0_19 = arith.constant 0 : index
    %c0_20 = arith.constant 0 : index
    %c0_21 = arith.constant 0 : index
    %22 = vector.load %arg3[%c0_19, %c0_20, %c0_21] : memref<1x8x32xbf16, #tpu.memory_space<vmem>>, vector<1x8x32xbf16>
    %23 = vector.shape_cast %22 : vector<1x8x32xbf16> to vector<8x32xbf16>
    %24 = vector.shape_cast %23 : vector<8x32xbf16> to vector<1x8x32xbf16>
    %25 = vector.broadcast %24 : vector<1x8x32xbf16> to vector<4x8x32xbf16>
    %c0_22 = arith.constant 0 : index
    %c0_23 = arith.constant 0 : index
    %c0_24 = arith.constant 0 : index
    %26 = vector.load %arg8[%c0_22, %c0_23, %c0_24] : memref<4x32x8xbf16, #tpu.memory_space<vmem>>, vector<4x32x8xbf16>
    "tpu.trace_start"() <{level = 10 : i32, message = "hsc,hcd->hsd"}> : () -> ()
    %cst_25 = arith.constant dense<0.000000e+00> : vector<4x8x8xf32>
    %27 = tpu.matmul %25, %26, %cst_25 {dimension_numbers = #tpu.dot_dimension_numbers<[2], [1], [1], [2], [0, 0, 0, 1, 1, 2], [0], [0]>} : vector<4x8x32xbf16>, vector<4x32x8xbf16>, vector<4x8x8xf32> -> vector<4x8x8xf32>
    "tpu.trace_stop"() : () -> ()
    %c0_26 = arith.constant 0 : index
    %c0_27 = arith.constant 0 : index
    %c0_28 = arith.constant 0 : index
    %28 = vector.load %arg9[%c0_26, %c0_27, %c0_28] : memref<4x1x8xf32, #tpu.memory_space<vmem>>, vector<4x1x8xf32>
    %29 = vector.broadcast %28 : vector<4x1x8xf32> to vector<4x8x8xf32>
    %30 = arith.addf %27, %29 : vector<4x8x8xf32>
    %31 = arith.truncf %30 : vector<4x8x8xf32> to vector<4x8x8xbf16>
    "tpu.trace_start"() <{level = 10 : i32, message = "hqd,hkd->hqk"}> : () -> ()
    %cst_29 = arith.constant dense<0.000000e+00> : vector<4x8x8xf32>
    %32 = tpu.matmul %11, %21, %cst_29 {dimension_numbers = #tpu.dot_dimension_numbers<[2], [2], [1], [1], [0, 0, 0, 1, 1, 1], [0], [0]>} : vector<4x8x8xbf16>, vector<4x8x8xbf16>, vector<4x8x8xf32> -> vector<4x8x8xf32>
    "tpu.trace_stop"() : () -> ()
    %cst_30 = arith.constant dense<0xFF800000> : vector<4x8xf32>
    %33 = vector.multi_reduction <maximumf>, %32, %cst_30 [2] : vector<4x8x8xf32> to vector<4x8xf32>
    %34 = vector.shape_cast %33 : vector<4x8xf32> to vector<4x8x1xf32>
    %35 = vector.broadcast %34 : vector<4x8x1xf32> to vector<4x8x8xf32>
    %36 = arith.subf %32, %35 : vector<4x8x8xf32>
    %37 = math.exp %36 : vector<4x8x8xf32>
    %cst_31 = arith.constant dense<0.000000e+00> : vector<4x8xf32>
    %38 = vector.multi_reduction <add>, %37, %cst_31 [2] : vector<4x8x8xf32> to vector<4x8xf32>
    %39 = vector.shape_cast %38 : vector<4x8xf32> to vector<4x8x1xf32>
    %40 = tpu.reciprocal %39 {approx = true} : vector<4x8x1xf32> -> vector<4x8x1xf32>
    %41 = vector.broadcast %40 : vector<4x8x1xf32> to vector<4x8x8xf32>
    %42 = arith.mulf %37, %41 : vector<4x8x8xf32>
    %43 = arith.truncf %42 : vector<4x8x8xf32> to vector<4x8x8xbf16>
    "tpu.trace_start"() <{level = 10 : i32, message = "hqk,hkd->hqd"}> : () -> ()
    %cst_32 = arith.constant dense<0.000000e+00> : vector<4x8x8xf32>
    %44 = tpu.matmul %43, %31, %cst_32 {dimension_numbers = #tpu.dot_dimension_numbers<[2], [1], [1], [2], [0, 0, 0, 1, 1, 2], [0], [0]>} : vector<4x8x8xbf16>, vector<4x8x8xbf16>, vector<4x8x8xf32> -> vector<4x8x8xf32>
    "tpu.trace_stop"() : () -> ()
    %45 = arith.truncf %44 : vector<4x8x8xf32> to vector<4x8x8xbf16>
    %c0_33 = arith.constant 0 : index
    %c0_34 = arith.constant 0 : index
    %c0_35 = arith.constant 0 : index
    %46 = vector.load %arg10[%c0_33, %c0_34, %c0_35] : memref<4x8x32xbf16, #tpu.memory_space<vmem>>, vector<4x8x32xbf16>
    "tpu.trace_start"() <{level = 10 : i32, message = "hqd,hdo->hqo"}> : () -> ()
    %cst_36 = arith.constant dense<0.000000e+00> : vector<4x8x32xf32>
    %47 = tpu.matmul %45, %46, %cst_36 {dimension_numbers = #tpu.dot_dimension_numbers<[2], [1], [1], [2], [0, 0, 0, 1, 1, 2], [0], [0]>} : vector<4x8x8xbf16>, vector<4x8x32xbf16>, vector<4x8x32xf32> -> vector<4x8x32xf32>
    "tpu.trace_stop"() : () -> ()
    %48 = vector.extract_strided_slice %47 {offsets = [0, 0, 0], sizes = [1, 8, 32], strides = [1, 1, 1]} : vector<4x8x32xf32> to vector<1x8x32xf32>
    %49 = vector.shape_cast %48 : vector<1x8x32xf32> to vector<8x32xf32>
    %c0_37 = arith.constant 0 : index
    %c0_38 = arith.constant 0 : index
    %50 = vector.load %arg11[%c0_37, %c0_38] : memref<1x32xf32, #tpu.memory_space<vmem>>, vector<1x32xf32>
    %51 = vector.broadcast %50 : vector<1x32xf32> to vector<8x32xf32>
    %52 = arith.addf %49, %51 : vector<8x32xf32>
    %53 = vector.extract_strided_slice %47 {offsets = [1, 0, 0], sizes = [1, 8, 32], strides = [1, 1, 1]} : vector<4x8x32xf32> to vector<1x8x32xf32>
    %54 = vector.shape_cast %53 : vector<1x8x32xf32> to vector<8x32xf32>
    %55 = arith.addf %52, %54 : vector<8x32xf32>
    %56 = vector.extract_strided_slice %47 {offsets = [2, 0, 0], sizes = [1, 8, 32], strides = [1, 1, 1]} : vector<4x8x32xf32> to vector<1x8x32xf32>
    %57 = vector.shape_cast %56 : vector<1x8x32xf32> to vector<8x32xf32>
    %58 = arith.addf %55, %57 : vector<8x32xf32>
    %59 = vector.extract_strided_slice %47 {offsets = [3, 0, 0], sizes = [1, 8, 32], strides = [1, 1, 1]} : vector<4x8x32xf32> to vector<1x8x32xf32>
    %60 = vector.shape_cast %59 : vector<1x8x32xf32> to vector<8x32xf32>
    %61 = arith.addf %58, %60 : vector<8x32xf32>
    %c0_39 = arith.constant 0 : index
    %c0_40 = arith.constant 0 : index
    %c0_41 = arith.constant 0 : index
    %62 = vector.load %arg12[%c0_39, %c0_40, %c0_41] : memref<1x8x32xf32, #tpu.memory_space<vmem>>, vector<1x8x32xf32>
    %63 = vector.shape_cast %62 : vector<1x8x32xf32> to vector<8x32xf32>
    %64 = vector.shape_cast %61 : vector<8x32xf32> to vector<1x8x32xf32>
    tpu.vector_store %arg12[%c0_39, %c0_40, %c0_41], %64 {strides = array<i32>} : memref<1x8x32xf32, #tpu.memory_space<vmem>>, vector<1x8x32xf32>,
    return
  }
  func.func @transform_0(%arg0: i32) -> (i32, i32, i32) {
    %c0_i32 = arith.constant 0 : i32
    %c0_i32_0 = arith.constant 0 : i32
    %c0_i32_1 = arith.constant 0 : i32
    return %arg0, %c0_i32, %c0_i32_0 : i32, i32, i32
  }
  func.func @transform_1(%arg0: i32) -> (i32, i32, i32) {
    %c0_i32 = arith.constant 0 : i32
    %c0_i32_0 = arith.constant 0 : i32
    %c0_i32_1 = arith.constant 0 : i32
    return %arg0, %c0_i32, %c0_i32_0 : i32, i32, i32
  }
  func.func @transform_2(%arg0: i32) -> (i32, i32, i32) {
    %c0_i32 = arith.constant 0 : i32
    %c0_i32_0 = arith.constant 0 : i32
    %c0_i32_1 = arith.constant 0 : i32
    return %arg0, %c0_i32, %c0_i32_0 : i32, i32, i32
  }
  func.func @transform_3(%arg0: i32) -> (i32, i32, i32) {
    %c0_i32 = arith.constant 0 : i32
    %c0_i32_0 = arith.constant 0 : i32
    %c0_i32_1 = arith.constant 0 : i32
    %c0_i32_2 = arith.constant 0 : i32
    return %c0_i32, %c0_i32_0, %c0_i32_1 : i32, i32, i32
  }
  func.func @transform_4(%arg0: i32) -> (i32, i32, i32) {
    %c0_i32 = arith.constant 0 : i32
    %c0_i32_0 = arith.constant 0 : i32
    %c0_i32_1 = arith.constant 0 : i32
    %c0_i32_2 = arith.constant 0 : i32
    return %c0_i32, %c0_i32_0, %c0_i32_1 : i32, i32, i32
  }
  func.func @transform_5(%arg0: i32) -> (i32, i32, i32) {
    %c0_i32 = arith.constant 0 : i32
    %c0_i32_0 = arith.constant 0 : i32
    %c0_i32_1 = arith.constant 0 : i32
    %c0_i32_2 = arith.constant 0 : i32
    return %c0_i32, %c0_i32_0, %c0_i32_1 : i32, i32, i32
  }
  func.func @transform_6(%arg0: i32) -> (i32, i32, i32) {
    %c0_i32 = arith.constant 0 : i32
    %c0_i32_0 = arith.constant 0 : i32
    %c0_i32_1 = arith.constant 0 : i32
    %c0_i32_2 = arith.constant 0 : i32
    return %c0_i32, %c0_i32_0, %c0_i32_1 : i32, i32, i32
  }
  func.func @transform_7(%arg0: i32) -> (i32, i32, i32) {
    %c0_i32 = arith.constant 0 : i32
    %c0_i32_0 = arith.constant 0 : i32
    %c0_i32_1 = arith.constant 0 : i32
    %c0_i32_2 = arith.constant 0 : i32
    return %c0_i32, %c0_i32_0, %c0_i32_1 : i32, i32, i32
  }
  func.func @transform_8(%arg0: i32) -> (i32, i32, i32) {
    %c0_i32 = arith.constant 0 : i32
    %c0_i32_0 = arith.constant 0 : i32
    %c0_i32_1 = arith.constant 0 : i32
    %c0_i32_2 = arith.constant 0 : i32
    return %c0_i32, %c0_i32_0, %c0_i32_1 : i32, i32, i32
  }
  func.func @transform_9(%arg0: i32) -> (i32, i32, i32) {
    %c0_i32 = arith.constant 0 : i32
    %c0_i32_0 = arith.constant 0 : i32
    %c0_i32_1 = arith.constant 0 : i32
    %c0_i32_2 = arith.constant 0 : i32
    return %c0_i32, %c0_i32_0, %c0_i32_1 : i32, i32, i32
  }
  func.func @transform_10(%arg0: i32) -> (i32, i32) {
    %c0_i32 = arith.constant 0 : i32
    %c0_i32_0 = arith.constant 0 : i32
    %c0_i32_1 = arith.constant 0 : i32
    return %c0_i32, %c0_i32_0 : i32, i32
  }
  func.func @transform_11(%arg0: i32) -> (i32, i32, i32) {
    %c0_i32 = arith.constant 0 : i32
    %c0_i32_0 = arith.constant 0 : i32
    %c0_i32_1 = arith.constant 0 : i32
    return %arg0, %c0_i32, %c0_i32_0 : i32, i32, i32
  }
}

</mosaic_0001>

<llo_original>
// kernel: tpu_custom_call.1
$region0: #{tpu_custom_call.1}
  #allocation0 [shape = 'u32[]', space=smem, size = 0x4, offset = 0x4, fixed_abs, tag = 'smem constant byte address 0x4 - core index']
  #allocation1 [shape = 'u32[144,128]{1,0:T(1,128)}', space=vmem, size = 0x12000, scoped, tag = 'internal scratch']
  %s0 = inlined_call_operand.vmem [shape: bf16[2,8,32], index: 0, kind: input, shape index: {}]
  %s1 = inlined_call_operand.vmem [shape: bf16[2,8,32], index: 1, kind: input, shape index: {}]
  %s2 = inlined_call_operand.vmem [shape: bf16[2,8,32], index: 2, kind: input, shape index: {}]
  %s3 = inlined_call_operand.vmem [shape: bf16[4,32,8], index: 3, kind: input, shape index: {}]
  %s4 = inlined_call_operand.vmem [shape: f32[4,1,8], index: 4, kind: input, shape index: {}]
  %s5 = inlined_call_operand.vmem [shape: bf16[4,32,8], index: 5, kind: input, shape index: {}]
  %s6 = inlined_call_operand.vmem [shape: f32[4,1,8], index: 6, kind: input, shape index: {}]
  %s7 = inlined_call_operand.vmem [shape: bf16[4,32,8], index: 7, kind: input, shape index: {}]
  %s8 = inlined_call_operand.vmem [shape: f32[4,1,8], index: 8, kind: input, shape index: {}]
  %s9 = inlined_call_operand.vmem [shape: bf16[4,8,32], index: 9, kind: input, shape index: {}]
  %s10 = inlined_call_operand.vmem [shape: f32[1,32], index: 10, kind: input, shape index: {}]
  %s11 = inlined_call_operand.hbm [shape: f32[2,8,32], index: 11, kind: output, shape index: {}]
  %s12 = sld [smem:[#allocation0]]
  $region77: #{tpu_custom_call.1} parent=0
    _
  %s14 = ssub.s32 1, %s12
  %s15 = scalar_select 0, %s14, %s12
  $region1: #{tpu_custom_call.1} parent=0
    #allocation2 [shape = 'u8[8192]{0}', space=vmem, size = 0x2000, scoped, tag = 'output window, operand 0']
    #allocation3 [shape = 's32[2]{0}', space=sflag, size = 0x8, scoped, tag = 'scoped memory for tpu_custom_call.1']
    %16 = vsyncpa [#allocation3], 0
    %s17 = scalar_lea.sflag [#allocation3], 1
    %18 = vsyncpa %s17, 0
    loop: start=0, step=1, limit=4
    $region2: #{tpu_custom_call.1} parent=1 // loop_pre_header
      _
    $region3: #{tpu_custom_call.1} parent=1 // loop_header
      %s20 = sphi 0, %s24
      %p21 = scmp.ge.s32.totalorder %s20, 4
      %s30 = sphi 0, %s32
      %s33 = sphi 0, %s30
      %s34 = sphi 0, %s33
      %s50 = sphi 0, %s34
      %s56 = sphi 0, %s58
      %s59 = sphi 0, %s56
      %s60 = sphi 0, %s59
      %s76 = sphi 0, %s60
      %s82 = sphi 0, %s84
      %s85 = sphi 0, %s82
      %s86 = sphi 0, %s85
      %s102 = sphi 0, %s86
      %s106 = sphi 0, %s106
      %s108 = sphi 0, %s106
      %s109 = sphi 0, %s108
      %s123 = sphi 0, %s109
      %s127 = sphi 0, %s127
      %s129 = sphi 0, %s127
      %s130 = sphi 0, %s129
      %s144 = sphi 0, %s130
      %s148 = sphi 0, %s148
      %s150 = sphi 0, %s148
      %s151 = sphi 0, %s150
      %s165 = sphi 0, %s151
      %s169 = sphi 0, %s169
      %s171 = sphi 0, %s169
      %s172 = sphi 0, %s171
      %s186 = sphi 0, %s172
      %s190 = sphi 0, %s190
      %s192 = sphi 0, %s190
      %s193 = sphi 0, %s192
      %s207 = sphi 0, %s193
      %s211 = sphi 0, %s211
      %s213 = sphi 0, %s211
      %s214 = sphi 0, %s213
      %s228 = sphi 0, %s214
      %s232 = sphi 0, %s232
      %s234 = sphi 0, %s232
      %s235 = sphi 0, %s234
      %s249 = sphi 0, %s235
      %s253 = sphi 0, %s253
      %s255 = sphi 0, %s253
      %s256 = sphi 0, %s255
      %s270 = sphi 0, %s256
      %s276 = sphi 0, %s278
      %s279 = sphi 0, %s276
      %s280 = sphi 0, %s279
      %s296 = sphi 0, %s280
    $region4: #{tpu_custom_call.1} parent=1 // loop_header_branch
      %23 = sbr.rel (%p21) target = $region8
    $region5: #{tpu_custom_call.1} parent=1 // loop_body
      %s25 = ssub.s32 %s20, 1
      %s26 = ssub.s32 %s20, 2
      %s27 = sadd.s32 %s20, 1
      %s28 = ssub.s32 %s20, %s27
      %p29 = scmp.eq.s32.totalorder %s28, 0
      %s31 = sadd.s32 %s30, 1
      %s32 = scalar_select %p29, %s30, %s31
      %p35 = pneg %p29
      %p36 = scmp.eq.s32.totalorder %s20, 1
      %p37 = por %p35, %p36
      %p38 = scmp.ne.s32.totalorder %s30, %s33
      %p39 = scmp.eq.s32.totalorder %s20, 0
      %p40 = por %p38, %p39
      %p41 = scmp.ne.s32.totalorder %s30, %s33
      %p42 = scmp.eq.s32.totalorder %s25, 1
      %p43 = por %p41, %p42
      %p44 = scmp.ne.s32.totalorder %s33, %s34
      %p45 = scmp.eq.s32.totalorder %s25, 0
      %p46 = por %p44, %p45
      %p47 = scmp.ne.s32.totalorder %s33, %s34
      %p48 = scmp.eq.s32.totalorder %s26, 1
      %p49 = por %p47, %p48
      %p51 = scmp.ne.s32.totalorder %s34, %s50
      %p52 = scmp.eq.s32.totalorder %s26, 0
      %p53 = por %p51, %p52
      %s54 = ssub.s32 %s20, %s27
      %p55 = scmp.eq.s32.totalorder %s54, 0
      %s57 = sadd.s32 %s56, 1
      %s58 = scalar_select %p55, %s56, %s57
      %p61 = pneg %p55
      %p62 = scmp.eq.s32.totalorder %s20, 1
      %p63 = por %p61, %p62
      %p64 = scmp.ne.s32.totalorder %s56, %s59
      %p65 = scmp.eq.s32.totalorder %s20, 0
      %p66 = por %p64, %p65
      %p67 = scmp.ne.s32.totalorder %s56, %s59
      %p68 = scmp.eq.s32.totalorder %s25, 1
      %p69 = por %p67, %p68
      %p70 = scmp.ne.s32.totalorder %s59, %s60
      %p71 = scmp.eq.s32.totalorder %s25, 0
      %p72 = por %p70, %p71
      %p73 = scmp.ne.s32.totalorder %s59, %s60
      %p74 = scmp.eq.s32.totalorder %s26, 1
      %p75 = por %p73, %p74
      %p77 = scmp.ne.s32.totalorder %s60, %s76
      %p78 = scmp.eq.s32.totalorder %s26, 0
      %p79 = por %p77, %p78
      %s80 = ssub.s32 %s20, %s27
      %p81 = scmp.eq.s32.totalorder %s80, 0
      %s83 = sadd.s32 %s82, 1
      %s84 = scalar_select %p81, %s82, %s83
      %p87 = pneg %p81
      %p88 = scmp.eq.s32.totalorder %s20, 1
      %p89 = por %p87, %p88
      %p90 = scmp.ne.s32.totalorder %s82, %s85
      %p91 = scmp.eq.s32.totalorder %s20, 0
      %p92 = por %p90, %p91
      %p93 = scmp.ne.s32.totalorder %s82, %s85
      %p94 = scmp.eq.s32.totalorder %s25, 1
      %p95 = por %p93, %p94
      %p96 = scmp.ne.s32.totalorder %s85, %s86
      %p97 = scmp.eq.s32.totalorder %s25, 0
      %p98 = por %p96, %p97
      %p99 = scmp.ne.s32.totalorder %s85, %s86
      %p100 = scmp.eq.s32.totalorder %s26, 1
      %p101 = por %p99, %p100
      %p103 = scmp.ne.s32.totalorder %s86, %s102
      %p104 = scmp.eq.s32.totalorder %s26, 0
      %p105 = por %p103, %p104
      %s107 = sadd.s32 %s106, 1
      %p110 = scmp.eq.s32.totalorder %s20, 1
      %p111 = scmp.ne.s32.totalorder %s106, %s108
      %p112 = scmp.eq.s32.totalorder %s20, 0
      %p113 = por %p111, %p112
      %p114 = scmp.ne.s32.totalorder %s106, %s108
      %p115 = scmp.eq.s32.totalorder %s25, 1
      %p116 = por %p114, %p115
      %p117 = scmp.ne.s32.totalorder %s108, %s109
      %p118 = scmp.eq.s32.totalorder %s25, 0
      %p119 = por %p117, %p118
      %p120 = scmp.ne.s32.totalorder %s108, %s109
      %p121 = scmp.eq.s32.totalorder %s26, 1
      %p122 = por %p120, %p121
      %p124 = scmp.ne.s32.totalorder %s109, %s123
      %p125 = scmp.eq.s32.totalorder %s26, 0
      %p126 = por %p124, %p125
      %s128 = sadd.s32 %s127, 1
      %p131 = scmp.eq.s32.totalorder %s20, 1
      %p132 = scmp.ne.s32.totalorder %s127, %s129
      %p133 = scmp.eq.s32.totalorder %s20, 0
      %p134 = por %p132, %p133
      %p135 = scmp.ne.s32.totalorder %s127, %s129
      %p136 = scmp.eq.s32.totalorder %s25, 1
      %p137 = por %p135, %p136
      %p138 = scmp.ne.s32.totalorder %s129, %s130
      %p139 = scmp.eq.s32.totalorder %s25, 0
      %p140 = por %p138, %p139
      %p141 = scmp.ne.s32.totalorder %s129, %s130
      %p142 = scmp.eq.s32.totalorder %s26, 1
      %p143 = por %p141, %p142
      %p145 = scmp.ne.s32.totalorder %s130, %s144
      %p146 = scmp.eq.s32.totalorder %s26, 0
      %p147 = por %p145, %p146
      %s149 = sadd.s32 %s148, 1
      %p152 = scmp.eq.s32.totalorder %s20, 1
      %p153 = scmp.ne.s32.totalorder %s148, %s150
      %p154 = scmp.eq.s32.totalorder %s20, 0
      %p155 = por %p153, %p154
      %p156 = scmp.ne.s32.totalorder %s148, %s150
      %p157 = scmp.eq.s32.totalorder %s25, 1
      %p158 = por %p156, %p157
      %p159 = scmp.ne.s32.totalorder %s150, %s151
      %p160 = scmp.eq.s32.totalorder %s25, 0
      %p161 = por %p159, %p160
      %p162 = scmp.ne.s32.totalorder %s150, %s151
      %p163 = scmp.eq.s32.totalorder %s26, 1
      %p164 = por %p162, %p163
      %p166 = scmp.ne.s32.totalorder %s151, %s165
      %p167 = scmp.eq.s32.totalorder %s26, 0
      %p168 = por %p166, %p167
      %s170 = sadd.s32 %s169, 1
      %p173 = scmp.eq.s32.totalorder %s20, 1
      %p174 = scmp.ne.s32.totalorder %s169, %s171
      %p175 = scmp.eq.s32.totalorder %s20, 0
      %p176 = por %p174, %p175
      %p177 = scmp.ne.s32.totalorder %s169, %s171
      %p178 = scmp.eq.s32.totalorder %s25, 1
      %p179 = por %p177, %p178
      %p180 = scmp.ne.s32.totalorder %s171, %s172
      %p181 = scmp.eq.s32.totalorder %s25, 0
      %p182 = por %p180, %p181
      %p183 = scmp.ne.s32.totalorder %s171, %s172
      %p184 = scmp.eq.s32.totalorder %s26, 1
      %p185 = por %p183, %p184
      %p187 = scmp.ne.s32.totalorder %s172, %s186
      %p188 = scmp.eq.s32.totalorder %s26, 0
      %p189 = por %p187, %p188
      %s191 = sadd.s32 %s190, 1
      %p194 = scmp.eq.s32.totalorder %s20, 1
      %p195 = scmp.ne.s32.totalorder %s190, %s192
      %p196 = scmp.eq.s32.totalorder %s20, 0
      %p197 = por %p195, %p196
      %p198 = scmp.ne.s32.totalorder %s190, %s192
      %p199 = scmp.eq.s32.totalorder %s25, 1
      %p200 = por %p198, %p199
      %p201 = scmp.ne.s32.totalorder %s192, %s193
      %p202 = scmp.eq.s32.totalorder %s25, 0
      %p203 = por %p201, %p202
      %p204 = scmp.ne.s32.totalorder %s192, %s193
      %p205 = scmp.eq.s32.totalorder %s26, 1
      %p206 = por %p204, %p205
      %p208 = scmp.ne.s32.totalorder %s193, %s207
      %p209 = scmp.eq.s32.totalorder %s26, 0
      %p210 = por %p208, %p209
      %s212 = sadd.s32 %s211, 1
      %p215 = scmp.eq.s32.totalorder %s20, 1
      %p216 = scmp.ne.s32.totalorder %s211, %s213
      %p217 = scmp.eq.s32.totalorder %s20, 0
      %p218 = por %p216, %p217
      %p219 = scmp.ne.s32.totalorder %s211, %s213
      %p220 = scmp.eq.s32.totalorder %s25, 1
      %p221 = por %p219, %p220
      %p222 = scmp.ne.s32.totalorder %s213, %s214
      %p223 = scmp.eq.s32.totalorder %s25, 0
      %p224 = por %p222, %p223
      %p225 = scmp.ne.s32.totalorder %s213, %s214
      %p226 = scmp.eq.s32.totalorder %s26, 1
      %p227 = por %p225, %p226
      %p229 = scmp.ne.s32.totalorder %s214, %s228
      %p230 = scmp.eq.s32.totalorder %s26, 0
      %p231 = por %p229, %p230
      %s233 = sadd.s32 %s232, 1
      %p236 = scmp.eq.s32.totalorder %s20, 1
      %p237 = scmp.ne.s32.totalorder %s232, %s234
      %p238 = scmp.eq.s32.totalorder %s20, 0
      %p239 = por %p237, %p238
      %p240 = scmp.ne.s32.totalorder %s232, %s234
      %p241 = scmp.eq.s32.totalorder %s25, 1
      %p242 = por %p240, %p241
      %p243 = scmp.ne.s32.totalorder %s234, %s235
      %p244 = scmp.eq.s32.totalorder %s25, 0
      %p245 = por %p243, %p244
      %p246 = scmp.ne.s32.totalorder %s234, %s235
      %p247 = scmp.eq.s32.totalorder %s26, 1
      %p248 = por %p246, %p247
      %p250 = scmp.ne.s32.totalorder %s235, %s249
      %p251 = scmp.eq.s32.totalorder %s26, 0
      %p252 = por %p250, %p251
      %s254 = sadd.s32 %s253, 1
      %p257 = scmp.eq.s32.totalorder %s20, 1
      %p258 = scmp.ne.s32.totalorder %s253, %s255
      %p259 = scmp.eq.s32.totalorder %s20, 0
      %p260 = por %p258, %p259
      %p261 = scmp.ne.s32.totalorder %s253, %s255
      %p262 = scmp.eq.s32.totalorder %s25, 1
      %p263 = por %p261, %p262
      %p264 = scmp.ne.s32.totalorder %s255, %s256
      %p265 = scmp.eq.s32.totalorder %s25, 0
      %p266 = por %p264, %p265
      %p267 = scmp.ne.s32.totalorder %s255, %s256
      %p268 = scmp.eq.s32.totalorder %s26, 1
      %p269 = por %p267, %p268
      %p271 = scmp.ne.s32.totalorder %s256, %s270
      %p272 = scmp.eq.s32.totalorder %s26, 0
      %p273 = por %p271, %p272
      %s274 = ssub.s32 %s20, %s27
      %p275 = scmp.eq.s32.totalorder %s274, 0
      %s277 = sadd.s32 %s276, 1
      %s278 = scalar_select %p275, %s276, %s277
      %p281 = pneg %p275
      %p282 = scmp.eq.s32.totalorder %s20, 1
      %p283 = por %p281, %p282
      %p284 = scmp.ne.s32.totalorder %s276, %s279
      %p285 = scmp.eq.s32.totalorder %s20, 0
      %p286 = por %p284, %p285
      %p287 = scmp.ne.s32.totalorder %s276, %s279
      %p288 = scmp.eq.s32.totalorder %s25, 1
      %p289 = por %p287, %p288
      %p290 = scmp.ne.s32.totalorder %s279, %s280
      %p291 = scmp.eq.s32.totalorder %s25, 0
      %p292 = por %p290, %p291
      %p293 = scmp.ne.s32.totalorder %s279, %s280
      %p294 = scmp.eq.s32.totalorder %s26, 1
      %p295 = por %p293, %p294
      %p297 = scmp.ne.s32.totalorder %s280, %s296
      %p298 = scmp.eq.s32.totalorder %s26, 0
      %p299 = por %p297, %p298
      %p300 = scmp.le.s32.totalorder 1, %s20
      %p301 = scmp.lt.s32.totalorder %s20, 3
      %p302 = pnand %p300, %p301
      %p303 = pneg %p302
      // Predicated region
      $region9: #{tpu_custom_call.1} parent=5 // pred_check
        _
      $region10: #{tpu_custom_call.1} parent=5 // pred_check_branch
        %305 = sbr.rel (%p302) target = $region12
      $region11: #{tpu_custom_call.1} parent=5 // pred_region
        %s306 = ssub.s32 %s20, 1
        // Predicated region
        $region13: #{tpu_custom_call.1} parent=11 // pred_check
          %p307 = pneg %p119
        $region14: #{tpu_custom_call.1} parent=11 // pred_check_branch
          %309 = sbr.rel (%p307) target = $region16
        $region15: #{tpu_custom_call.1} parent=11 // pred_region
          _
        $region16: #{tpu_custom_call.1} parent=11 // pred_fallthru
          _
        // Predicated region
        $region17: #{tpu_custom_call.1} parent=11 // pred_check
          %p310 = pneg %p140
        $region18: #{tpu_custom_call.1} parent=11 // pred_check_branch
          %312 = sbr.rel (%p310) target = $region20
        $region19: #{tpu_custom_call.1} parent=11 // pred_region
          _
        $region20: #{tpu_custom_call.1} parent=11 // pred_fallthru
          _
        // Predicated region
        $region21: #{tpu_custom_call.1} parent=11 // pred_check
          %p313 = pneg %p161
        $region22: #{tpu_custom_call.1} parent=11 // pred_check_branch
          %315 = sbr.rel (%p313) target = $region24
        $region23: #{tpu_custom_call.1} parent=11 // pred_region
          _
        $region24: #{tpu_custom_call.1} parent=11 // pred_fallthru
          _
        // Predicated region
        $region25: #{tpu_custom_call.1} parent=11 // pred_check
          %p316 = pneg %p182
        $region26: #{tpu_custom_call.1} parent=11 // pred_check_branch
          %318 = sbr.rel (%p316) target = $region28
        $region27: #{tpu_custom_call.1} parent=11 // pred_region
          _
        $region28: #{tpu_custom_call.1} parent=11 // pred_fallthru
          _
        // Predicated region
        $region29: #{tpu_custom_call.1} parent=11 // pred_check
          %p319 = pneg %p203
        $region30: #{tpu_custom_call.1} parent=11 // pred_check_branch
          %321 = sbr.rel (%p319) target = $region32
        $region31: #{tpu_custom_call.1} parent=11 // pred_region
          _
        $region32: #{tpu_custom_call.1} parent=11 // pred_fallthru
          _
        // Predicated region
        $region33: #{tpu_custom_call.1} parent=11 // pred_check
          %p322 = pneg %p224
        $region34: #{tpu_custom_call.1} parent=11 // pred_check_branch
          %324 = sbr.rel (%p322) target = $region36
        $region35: #{tpu_custom_call.1} parent=11 // pred_region
          _
        $region36: #{tpu_custom_call.1} parent=11 // pred_fallthru
          _
        // Predicated region
        $region37: #{tpu_custom_call.1} parent=11 // pred_check
          %p325 = pneg %p245
        $region38: #{tpu_custom_call.1} parent=11 // pred_check_branch
          %327 = sbr.rel (%p325) target = $region40
        $region39: #{tpu_custom_call.1} parent=11 // pred_region
          _
        $region40: #{tpu_custom_call.1} parent=11 // pred_fallthru
          _
        // Predicated region
        $region41: #{tpu_custom_call.1} parent=11 // pred_check
          %p328 = pneg %p266
        $region42: #{tpu_custom_call.1} parent=11 // pred_check_branch
          %330 = sbr.rel (%p328) target = $region44
        $region43: #{tpu_custom_call.1} parent=11 // pred_region
          _
        $region44: #{tpu_custom_call.1} parent=11 // pred_fallthru
          _
      $region12: #{tpu_custom_call.1} parent=5 // pred_fallthru
        _
      %p331 = scmp.lt.s32.totalorder %s20, 2
      // Predicated region
      $region45: #{tpu_custom_call.1} parent=5 // pred_check
        %p332 = pneg %p331
      $region46: #{tpu_custom_call.1} parent=5 // pred_check_branch
        %334 = sbr.rel (%p332) target = $region48
      $region47: #{tpu_custom_call.1} parent=5 // pred_region
        // Predicated region
        $region49: #{tpu_custom_call.1} parent=47 // pred_check
          %p335 = pneg %p40
        $region50: #{tpu_custom_call.1} parent=47 // pred_check_branch
          %337 = sbr.rel (%p335) target = $region52
        $region51: #{tpu_custom_call.1} parent=47 // pred_region
          %p338 = scmp.lt.s32.totalorder %s20, 1
          %s339 = scalar_select %p338, %s20, 1
          %s340 = smul.addr %s339, 4
          %s341 = scalar_lea.vmem %s0, %s340
        $region52: #{tpu_custom_call.1} parent=47 // pred_fallthru
          _
        // Predicated region
        $region53: #{tpu_custom_call.1} parent=47 // pred_check
          %p342 = pneg %p66
        $region54: #{tpu_custom_call.1} parent=47 // pred_check_branch
          %344 = sbr.rel (%p342) target = $region56
        $region55: #{tpu_custom_call.1} parent=47 // pred_region
          %p345 = scmp.lt.s32.totalorder %s20, 1
          %s346 = scalar_select %p345, %s20, 1
          %s347 = smul.addr %s346, 4
          %s348 = scalar_lea.vmem %s1, %s347
        $region56: #{tpu_custom_call.1} parent=47 // pred_fallthru
          _
        // Predicated region
        $region57: #{tpu_custom_call.1} parent=47 // pred_check
          %p349 = pneg %p92
        $region58: #{tpu_custom_call.1} parent=47 // pred_check_branch
          %351 = sbr.rel (%p349) target = $region60
        $region59: #{tpu_custom_call.1} parent=47 // pred_region
          %p352 = scmp.lt.s32.totalorder %s20, 1
          %s353 = scalar_select %p352, %s20, 1
          %s354 = smul.addr %s353, 4
          %s355 = scalar_lea.vmem %s2, %s354
        $region60: #{tpu_custom_call.1} parent=47 // pred_fallthru
          _
      $region48: #{tpu_custom_call.1} parent=5 // pred_fallthru
        _
      %p356 = scmp.le.s32.totalorder 1, %s20
      %p357 = scmp.lt.s32.totalorder %s20, 3
      %p358 = pnand %p356, %p357
      %p359 = pneg %p358
      // Predicated region
      $region61: #{tpu_custom_call.1} parent=5 // pred_check
        _
      $region62: #{tpu_custom_call.1} parent=5 // pred_check_branch
        %361 = sbr.rel (%p358) target = $region64
      $region63: #{tpu_custom_call.1} parent=5 // pred_region
        %s362 = ssub.s32 %s20, 1
        %p363 = scmp.lt.s32.totalorder %s25, 1
        %s364 = scalar_select %p363, %s25, 1
        %s365 = smul.addr %s364, 4
        %s366 = scalar_lea.vmem %s0, %s365
        %p367 = pneg %p46
        %p368 = pneg %p43
        %p369 = scmp.lt.s32.totalorder %s25, 1
        %s370 = scalar_select %p369, %s25, 1
        %s371 = smul.addr %s370, 4
        %s372 = scalar_lea.vmem %s1, %s371
        %p373 = pneg %p72
        %p374 = pneg %p69
        %p375 = scmp.lt.s32.totalorder %s25, 1
        %s376 = scalar_select %p375, %s25, 1
        %s377 = smul.addr %s376, 4
        %s378 = scalar_lea.vmem %s2, %s377
        %p379 = pneg %p98
        %p380 = pneg %p95
        %p381 = pneg %p119
        %p382 = pneg %p116
        %p383 = pneg %p140
        %p384 = pneg %p137
        %p385 = pneg %p161
        %p386 = pneg %p158
        %p387 = pneg %p182
        %p388 = pneg %p179
        %p389 = pneg %p203
        %p390 = pneg %p200
        %p391 = pneg %p224
        %p392 = pneg %p221
        %p393 = pneg %p245
        %p394 = pneg %p242
        %p395 = pneg %p266
        %p396 = pneg %p263
        %p397 = pneg %p292
        %p398 = pneg %p289
        %s399 = sand.u32 %s279, 1
        %s400 = scalar_lea.sflag [#allocation3], %s399
        %s401 = sand.u32 %s279, 1
        %s402 = smul.addr %s401, 8
        %s403 = scalar_lea.vmem [#allocation2], %s402
        %p404 = scmp.lt.s32.totalorder %s25, 1
        %s405 = scalar_select %p404, %s25, 1
        %s406 = smul.addr %s405, 4
        %s407 = scalar_lea.vmem %s0, %s406
        %p408 = scmp.lt.s32.totalorder %s25, 1
        %s409 = scalar_select %p408, %s25, 1
        %s410 = smul.addr %s409, 4
        %s411 = scalar_lea.vmem %s1, %s410
        %p412 = scmp.lt.s32.totalorder %s25, 1
        %s413 = scalar_select %p412, %s25, 1
        %s414 = smul.addr %s413, 4
        %s415 = scalar_lea.vmem %s2, %s414
        %v417 = vld [vmem:[%s407] sm:$0xf]
        %v418 = vld [vmem:[%s3] sm:$0xf]
        %v419 = vld [vmem:[%s3 + $0x4] sm:$0xf]
        %v420 = vld [vmem:[%s3 + $0x8] sm:$0xf]
        %v421 = vld [vmem:[%s3 + $0xc] sm:$0xf]
        %v422 = vld [vmem:[%s3 + $0x10] sm:$0xf]
        %v423 = vld [vmem:[%s3 + $0x14] sm:$0xf]
        %v424 = vld [vmem:[%s3 + $0x18] sm:$0xf]
        %v425 = vld [vmem:[%s3 + $0x1c] sm:$0xf]
        %v426 = vld [vmem:[%s3 + $0x20] sm:$0xf]
        %v427 = vld [vmem:[%s3 + $0x24] sm:$0xf]
        %v428 = vld [vmem:[%s3 + $0x28] sm:$0xf]
        %v429 = vld [vmem:[%s3 + $0x2c] sm:$0xf]
        %v430 = vld [vmem:[%s3 + $0x30] sm:$0xf]
        %v431 = vld [vmem:[%s3 + $0x34] sm:$0xf]
        %v432 = vld [vmem:[%s3 + $0x38] sm:$0xf]
        %v433 = vld [vmem:[%s3 + $0x3c] sm:$0xf]
        %v434 = vld [vmem:[%s4] sm:$0x1]
        %v435 = vld [vmem:[%s4 + $0x1] sm:$0x1]
        %v436 = vld [vmem:[%s4 + $0x2] sm:$0x1]
        %v437 = vld [vmem:[%s4 + $0x3] sm:$0x1]
        %v442 = vlaneseq
        %v443 = vshrl.u32 %v442, 7
        %v444 = vsub.s32 0, %v443
        %v445 = vrot.slane %v434, %v444
        %v446 = vlaneseq
        %v447 = vshrl.u32 %v446, 7
        %v448 = vsub.s32 0, %v447
        %v449 = vrot.slane %v435, %v448
        %v450 = vlaneseq
        %v451 = vshrl.u32 %v450, 7
        %v452 = vsub.s32 0, %v451
        %v453 = vrot.slane %v436, %v452
        %v454 = vlaneseq
        %v455 = vshrl.u32 %v454, 7
        %v456 = vsub.s32 0, %v455
        %v457 = vrot.slane %v437, %v456
        %v466 = vunpack.c.l.b16 %v418
        %v467 = vunpack.c.l.b16 %v419
        %v468 = vunpack.c.l.b16 %v420
        %v469 = vunpack.c.l.b16 %v421
        %v470 = vpack.c.b16 %v467, %v466
        %v471 = vpack.c.b16 %v469, %v468
        %vm474 = vcmask 261120
        %v476 = vsel %vm474, %v417, 0
        %478 = vmatprep.subr.bf16.mxu0 0
        %479 = vmatpush1.bf16.msra.mxu0 %v470
        %480 = vmatprep.subr.bf16.mxu0 0
        %481 = vmatpush1.bf16.msra.mxu0 %v471
        %482 = vmatprep.subr.bf16.mxu0 0
        %483 = vmatpush1.bf16.msra.mxu0 0
        %484 = vmatprep.subr.bf16.mxu0 0
        %485 = vmatpush1.bf16.msra.mxu0 0
        %486 = vmatprep.subr.bf16.mxu0 0
        %487 = vmatpush1.bf16.msra.mxu0 0
        %488 = vmatprep.subr.bf16.mxu0 0
        %489 = vmatpush1.bf16.msra.mxu0 0
        %490 = vmatprep.subr.bf16.mxu0 0
        %491 = vmatpush1.bf16.msra.mxu0 0
        %492 = vmatprep.subr.bf16.mxu0 0
        %493 = vmatpush1.bf16.msra.mxu0 0
        %494 = vmatprep.subr.bf16.mxu0 0
        %495 = vmatpush1.bf16.msra.mxu0 0
        %496 = vmatprep.subr.bf16.mxu0 0
        %497 = vmatpush1.bf16.msra.mxu0 0
        %498 = vmatprep.subr.bf16.mxu0 0
        %499 = vmatpush1.bf16.msra.mxu0 0
        %500 = vmatprep.subr.bf16.mxu0 0
        %501 = vmatpush1.bf16.msra.mxu0 0
        %502 = vmatprep.subr.bf16.mxu0 0
        %503 = vmatpush1.bf16.msra.mxu0 0
        %504 = vmatprep.subr.bf16.mxu0 0
        %505 = vmatpush1.bf16.msra.mxu0 0
        %506 = vmatprep.subr.bf16.mxu0 0
        %507 = vmatpush1.bf16.msra.mxu0 0
        %508 = vmatprep.subr.bf16.mxu0 0
        %509 = vmatpush1.bf16.msra.mxu0 0
        %510 = vmatprep.mubr.bf16.mxu0 0
        %511 = vmatmul.mubr.bf16.gmra.mrb[0].mxu0 %v476
        %v512 = vpop.f32.mrb[0].mxu0
        %v513 = vadd.f32 %v445, %v512
        %v514 = vpop.f32.mrb[0].mxu0
        %v515 = vpop.f32.mrb[0].mxu0
        %v516 = vpop.f32.mrb[0].mxu0
        %517 = vdwg.mxu0
        %v522 = vunpack.c.l.b16 %v422
        %v523 = vunpack.c.l.b16 %v423
        %v524 = vunpack.c.l.b16 %v424
        %v525 = vunpack.c.l.b16 %v425
        %v526 = vpack.c.b16 %v523, %v522
        %v527 = vpack.c.b16 %v525, %v524
        %530 = vmatprep.subr.bf16.mxu0 0
        %531 = vmatpush1.bf16.msra.mxu0 %v526
        %532 = vmatprep.subr.bf16.mxu0 0
        %533 = vmatpush1.bf16.msra.mxu0 %v527
        %534 = vmatprep.subr.bf16.mxu0 0
        %535 = vmatpush1.bf16.msra.mxu0 0
        %536 = vmatprep.subr.bf16.mxu0 0
        %537 = vmatpush1.bf16.msra.mxu0 0
        %538 = vmatprep.subr.bf16.mxu0 0
        %539 = vmatpush1.bf16.msra.mxu0 0
        %540 = vmatprep.subr.bf16.mxu0 0
        %541 = vmatpush1.bf16.msra.mxu0 0
        %542 = vmatprep.subr.bf16.mxu0 0
        %543 = vmatpush1.bf16.msra.mxu0 0
        %544 = vmatprep.subr.bf16.mxu0 0
        %545 = vmatpush1.bf16.msra.mxu0 0
        %546 = vmatprep.subr.bf16.mxu0 0
        %547 = vmatpush1.bf16.msra.mxu0 0
        %548 = vmatprep.subr.bf16.mxu0 0
        %549 = vmatpush1.bf16.msra.mxu0 0
        %550 = vmatprep.subr.bf16.mxu0 0
        %551 = vmatpush1.bf16.msra.mxu0 0
        %552 = vmatprep.subr.bf16.mxu0 0
        %553 = vmatpush1.bf16.msra.mxu0 0
        %554 = vmatprep.subr.bf16.mxu0 0
        %555 = vmatpush1.bf16.msra.mxu0 0
        %556 = vmatprep.subr.bf16.mxu0 0
        %557 = vmatpush1.bf16.msra.mxu0 0
        %558 = vmatprep.subr.bf16.mxu0 0
        %559 = vmatpush1.bf16.msra.mxu0 0
        %560 = vmatprep.subr.bf16.mxu0 0
        %561 = vmatpush1.bf16.msra.mxu0 0
        %562 = vmatprep.mubr.bf16.mxu0 0
        %563 = vmatmul.mubr.bf16.gmra.mrb[0].mxu0 %v476
        %v564 = vpop.f32.mrb[0].mxu0
        %v565 = vadd.f32 %v449, %v564
        %v566 = vpop.f32.mrb[0].mxu0
        %v567 = vpop.f32.mrb[0].mxu0
        %v568 = vpop.f32.mrb[0].mxu0
        %569 = vdwg.mxu0
        %v574 = vunpack.c.l.b16 %v426
        %v575 = vunpack.c.l.b16 %v427
        %v576 = vunpack.c.l.b16 %v428
        %v577 = vunpack.c.l.b16 %v429
        %v578 = vpack.c.b16 %v575, %v574
        %v579 = vpack.c.b16 %v577, %v576
        %582 = vmatprep.subr.bf16.mxu0 0
        %583 = vmatpush1.bf16.msra.mxu0 %v578
        %584 = vmatprep.subr.bf16.mxu0 0
        %585 = vmatpush1.bf16.msra.mxu0 %v579
        %586 = vmatprep.subr.bf16.mxu0 0
        %587 = vmatpush1.bf16.msra.mxu0 0
        %588 = vmatprep.subr.bf16.mxu0 0
        %589 = vmatpush1.bf16.msra.mxu0 0
        %590 = vmatprep.subr.bf16.mxu0 0
        %591 = vmatpush1.bf16.msra.mxu0 0
        %592 = vmatprep.subr.bf16.mxu0 0
        %593 = vmatpush1.bf16.msra.mxu0 0
        %594 = vmatprep.subr.bf16.mxu0 0
        %595 = vmatpush1.bf16.msra.mxu0 0
        %596 = vmatprep.subr.bf16.mxu0 0
        %597 = vmatpush1.bf16.msra.mxu0 0
        %598 = vmatprep.subr.bf16.mxu0 0
        %599 = vmatpush1.bf16.msra.mxu0 0
        %600 = vmatprep.subr.bf16.mxu0 0
        %601 = vmatpush1.bf16.msra.mxu0 0
        %602 = vmatprep.subr.bf16.mxu0 0
        %603 = vmatpush1.bf16.msra.mxu0 0
        %604 = vmatprep.subr.bf16.mxu0 0
        %605 = vmatpush1.bf16.msra.mxu0 0
        %606 = vmatprep.subr.bf16.mxu0 0
        %607 = vmatpush1.bf16.msra.mxu0 0
        %608 = vmatprep.subr.bf16.mxu0 0
        %609 = vmatpush1.bf16.msra.mxu0 0
        %610 = vmatprep.subr.bf16.mxu0 0
        %611 = vmatpush1.bf16.msra.mxu0 0
        %612 = vmatprep.subr.bf16.mxu0 0
        %613 = vmatpush1.bf16.msra.mxu0 0
        %614 = vmatprep.mubr.bf16.mxu0 0
        %615 = vmatmul.mubr.bf16.gmra.mrb[0].mxu0 %v476
        %v616 = vpop.f32.mrb[0].mxu0
        %v617 = vadd.f32 %v453, %v616
        %v618 = vpop.f32.mrb[0].mxu0
        %v619 = vpop.f32.mrb[0].mxu0
        %v620 = vpop.f32.mrb[0].mxu0
        %621 = vdwg.mxu0
        %v626 = vunpack.c.l.b16 %v430
        %v627 = vunpack.c.l.b16 %v431
        %v628 = vunpack.c.l.b16 %v432
        %v629 = vunpack.c.l.b16 %v433
        %v630 = vpack.c.b16 %v627, %v626
        %v631 = vpack.c.b16 %v629, %v628
        %634 = vmatprep.subr.bf16.mxu0 0
        %635 = vmatpush1.bf16.msra.mxu0 %v630
        %636 = vmatprep.subr.bf16.mxu0 0
        %637 = vmatpush1.bf16.msra.mxu0 %v631
        %638 = vmatprep.subr.bf16.mxu0 0
        %639 = vmatpush1.bf16.msra.mxu0 0
        %640 = vmatprep.subr.bf16.mxu0 0
        %641 = vmatpush1.bf16.msra.mxu0 0
        %642 = vmatprep.subr.bf16.mxu0 0
        %643 = vmatpush1.bf16.msra.mxu0 0
        %644 = vmatprep.subr.bf16.mxu0 0
        %645 = vmatpush1.bf16.msra.mxu0 0
        %646 = vmatprep.subr.bf16.mxu0 0
        %647 = vmatpush1.bf16.msra.mxu0 0
        %648 = vmatprep.subr.bf16.mxu0 0
        %649 = vmatpush1.bf16.msra.mxu0 0
        %650 = vmatprep.subr.bf16.mxu0 0
        %651 = vmatpush1.bf16.msra.mxu0 0
        %652 = vmatprep.subr.bf16.mxu0 0
        %653 = vmatpush1.bf16.msra.mxu0 0
        %654 = vmatprep.subr.bf16.mxu0 0
        %655 = vmatpush1.bf16.msra.mxu0 0
        %656 = vmatprep.subr.bf16.mxu0 0
        %657 = vmatpush1.bf16.msra.mxu0 0
        %658 = vmatprep.subr.bf16.mxu0 0
        %659 = vmatpush1.bf16.msra.mxu0 0
        %660 = vmatprep.subr.bf16.mxu0 0
        %661 = vmatpush1.bf16.msra.mxu0 0
        %662 = vmatprep.subr.bf16.mxu0 0
        %663 = vmatpush1.bf16.msra.mxu0 0
        %664 = vmatprep.subr.bf16.mxu0 0
        %665 = vmatpush1.bf16.msra.mxu0 0
        %666 = vmatprep.mubr.bf16.mxu0 0
        %667 = vmatmul.mubr.bf16.gmra.mrb[0].mxu0 %v476
        %v668 = vpop.f32.mrb[0].mxu0
        %v669 = vadd.f32 %v457, %v668
        %v670 = vpop.f32.mrb[0].mxu0
        %v671 = vpop.f32.mrb[0].mxu0
        %v672 = vpop.f32.mrb[0].mxu0
        %673 = vdwg.mxu0
        %v674 = vmul.f32 %v513, 0.35355338
        %v675 = vmul.f32 %v565, 0.35355338
        %v676 = vmul.f32 %v617, 0.35355338
        %v677 = vmul.f32 %v669, 0.35355338
        %v678 = vpack.c.bf16 %v674, %v674
        %v679 = vpack.c.bf16 %v675, %v675
        %v680 = vpack.c.bf16 %v676, %v676
        %v681 = vpack.c.bf16 %v677, %v677
        %v682 = vld [vmem:[%s411] sm:$0xf]
        %v683 = vld [vmem:[%s5] sm:$0xf]
        %v684 = vld [vmem:[%s5 + $0x4] sm:$0xf]
        %v685 = vld [vmem:[%s5 + $0x8] sm:$0xf]
        %v686 = vld [vmem:[%s5 + $0xc] sm:$0xf]
        %v687 = vld [vmem:[%s5 + $0x10] sm:$0xf]
        %v688 = vld [vmem:[%s5 + $0x14] sm:$0xf]
        %v689 = vld [vmem:[%s5 + $0x18] sm:$0xf]
        %v690 = vld [vmem:[%s5 + $0x1c] sm:$0xf]
        %v691 = vld [vmem:[%s5 + $0x20] sm:$0xf]
        %v692 = vld [vmem:[%s5 + $0x24] sm:$0xf]
        %v693 = vld [vmem:[%s5 + $0x28] sm:$0xf]
        %v694 = vld [vmem:[%s5 + $0x2c] sm:$0xf]
        %v695 = vld [vmem:[%s5 + $0x30] sm:$0xf]
        %v696 = vld [vmem:[%s5 + $0x34] sm:$0xf]
        %v697 = vld [vmem:[%s5 + $0x38] sm:$0xf]
        %v698 = vld [vmem:[%s5 + $0x3c] sm:$0xf]
        %v699 = vld [vmem:[%s6] sm:$0x1]
        %v700 = vld [vmem:[%s6 + $0x1] sm:$0x1]
        %v701 = vld [vmem:[%s6 + $0x2] sm:$0x1]
        %v702 = vld [vmem:[%s6 + $0x3] sm:$0x1]
        %v707 = vlaneseq
        %v708 = vshrl.u32 %v707, 7
        %v709 = vsub.s32 0, %v708
        %v710 = vrot.slane %v699, %v709
        %v711 = vlaneseq
        %v712 = vshrl.u32 %v711, 7
        %v713 = vsub.s32 0, %v712
        %v714 = vrot.slane %v700, %v713
        %v715 = vlaneseq
        %v716 = vshrl.u32 %v715, 7
        %v717 = vsub.s32 0, %v716
        %v718 = vrot.slane %v701, %v717
        %v719 = vlaneseq
        %v720 = vshrl.u32 %v719, 7
        %v721 = vsub.s32 0, %v720
        %v722 = vrot.slane %v702, %v721
        %v731 = vunpack.c.l.b16 %v683
        %v732 = vunpack.c.l.b16 %v684
        %v733 = vunpack.c.l.b16 %v685
        %v734 = vunpack.c.l.b16 %v686
        %v735 = vpack.c.b16 %v732, %v731
        %v736 = vpack.c.b16 %v734, %v733
        %v740 = vsel %vm474, %v682, 0
        %742 = vmatprep.subr.bf16.mxu0 0
        %743 = vmatpush1.bf16.msra.mxu0 %v735
        %744 = vmatprep.subr.bf16.mxu0 0
        %745 = vmatpush1.bf16.msra.mxu0 %v736
        %746 = vmatprep.subr.bf16.mxu0 0
        %747 = vmatpush1.bf16.msra.mxu0 0
        %748 = vmatprep.subr.bf16.mxu0 0
        %749 = vmatpush1.bf16.msra.mxu0 0
        %750 = vmatprep.subr.bf16.mxu0 0
        %751 = vmatpush1.bf16.msra.mxu0 0
        %752 = vmatprep.subr.bf16.mxu0 0
        %753 = vmatpush1.bf16.msra.mxu0 0
        %754 = vmatprep.subr.bf16.mxu0 0
        %755 = vmatpush1.bf16.msra.mxu0 0
        %756 = vmatprep.subr.bf16.mxu0 0
        %757 = vmatpush1.bf16.msra.mxu0 0
        %758 = vmatprep.subr.bf16.mxu0 0
        %759 = vmatpush1.bf16.msra.mxu0 0
        %760 = vmatprep.subr.bf16.mxu0 0
        %761 = vmatpush1.bf16.msra.mxu0 0
        %762 = vmatprep.subr.bf16.mxu0 0
        %763 = vmatpush1.bf16.msra.mxu0 0
        %764 = vmatprep.subr.bf16.mxu0 0
        %765 = vmatpush1.bf16.msra.mxu0 0
        %766 = vmatprep.subr.bf16.mxu0 0
        %767 = vmatpush1.bf16.msra.mxu0 0
        %768 = vmatprep.subr.bf16.mxu0 0
        %769 = vmatpush1.bf16.msra.mxu0 0
        %770 = vmatprep.subr.bf16.mxu0 0
        %771 = vmatpush1.bf16.msra.mxu0 0
        %772 = vmatprep.subr.bf16.mxu0 0
        %773 = vmatpush1.bf16.msra.mxu0 0
        %774 = vmatprep.mubr.bf16.mxu0 0
        %775 = vmatmul.mubr.bf16.gmra.mrb[0].mxu0 %v740
        %v776 = vpop.f32.mrb[0].mxu0
        %v777 = vadd.f32 %v710, %v776
        %v778 = vpop.f32.mrb[0].mxu0
        %v779 = vpop.f32.mrb[0].mxu0
        %v780 = vpop.f32.mrb[0].mxu0
        %781 = vdwg.mxu0
        %v786 = vunpack.c.l.b16 %v687
        %v787 = vunpack.c.l.b16 %v688
        %v788 = vunpack.c.l.b16 %v689
        %v789 = vunpack.c.l.b16 %v690
        %v790 = vpack.c.b16 %v787, %v786
        %v791 = vpack.c.b16 %v789, %v788
        %794 = vmatprep.subr.bf16.mxu0 0
        %795 = vmatpush1.bf16.msra.mxu0 %v790
        %796 = vmatprep.subr.bf16.mxu0 0
        %797 = vmatpush1.bf16.msra.mxu0 %v791
        %798 = vmatprep.subr.bf16.mxu0 0
        %799 = vmatpush1.bf16.msra.mxu0 0
        %800 = vmatprep.subr.bf16.mxu0 0
        %801 = vmatpush1.bf16.msra.mxu0 0
        %802 = vmatprep.subr.bf16.mxu0 0
        %803 = vmatpush1.bf16.msra.mxu0 0
        %804 = vmatprep.subr.bf16.mxu0 0
        %805 = vmatpush1.bf16.msra.mxu0 0
        %806 = vmatprep.subr.bf16.mxu0 0
        %807 = vmatpush1.bf16.msra.mxu0 0
        %808 = vmatprep.subr.bf16.mxu0 0
        %809 = vmatpush1.bf16.msra.mxu0 0
        %810 = vmatprep.subr.bf16.mxu0 0
        %811 = vmatpush1.bf16.msra.mxu0 0
        %812 = vmatprep.subr.bf16.mxu0 0
        %813 = vmatpush1.bf16.msra.mxu0 0
        %814 = vmatprep.subr.bf16.mxu0 0
        %815 = vmatpush1.bf16.msra.mxu0 0
        %816 = vmatprep.subr.bf16.mxu0 0
        %817 = vmatpush1.bf16.msra.mxu0 0
        %818 = vmatprep.subr.bf16.mxu0 0
        %819 = vmatpush1.bf16.msra.mxu0 0
        %820 = vmatprep.subr.bf16.mxu0 0
        %821 = vmatpush1.bf16.msra.mxu0 0
        %822 = vmatprep.subr.bf16.mxu0 0
        %823 = vmatpush1.bf16.msra.mxu0 0
        %824 = vmatprep.subr.bf16.mxu0 0
        %825 = vmatpush1.bf16.msra.mxu0 0
        %826 = vmatprep.mubr.bf16.mxu0 0
        %827 = vmatmul.mubr.bf16.gmra.mrb[0].mxu0 %v740
        %v828 = vpop.f32.mrb[0].mxu0
        %v829 = vadd.f32 %v714, %v828
        %v830 = vpop.f32.mrb[0].mxu0
        %v831 = vpop.f32.mrb[0].mxu0
        %v832 = vpop.f32.mrb[0].mxu0
        %833 = vdwg.mxu0
        %v838 = vunpack.c.l.b16 %v691
        %v839 = vunpack.c.l.b16 %v692
        %v840 = vunpack.c.l.b16 %v693
        %v841 = vunpack.c.l.b16 %v694
        %v842 = vpack.c.b16 %v839, %v838
        %v843 = vpack.c.b16 %v841, %v840
        %846 = vmatprep.subr.bf16.mxu0 0
        %847 = vmatpush1.bf16.msra.mxu0 %v842
        %848 = vmatprep.subr.bf16.mxu0 0
        %849 = vmatpush1.bf16.msra.mxu0 %v843
        %850 = vmatprep.subr.bf16.mxu0 0
        %851 = vmatpush1.bf16.msra.mxu0 0
        %852 = vmatprep.subr.bf16.mxu0 0
        %853 = vmatpush1.bf16.msra.mxu0 0
        %854 = vmatprep.subr.bf16.mxu0 0
        %855 = vmatpush1.bf16.msra.mxu0 0
        %856 = vmatprep.subr.bf16.mxu0 0
        %857 = vmatpush1.bf16.msra.mxu0 0
        %858 = vmatprep.subr.bf16.mxu0 0
        %859 = vmatpush1.bf16.msra.mxu0 0
        %860 = vmatprep.subr.bf16.mxu0 0
        %861 = vmatpush1.bf16.msra.mxu0 0
        %862 = vmatprep.subr.bf16.mxu0 0
        %863 = vmatpush1.bf16.msra.mxu0 0
        %864 = vmatprep.subr.bf16.mxu0 0
        %865 = vmatpush1.bf16.msra.mxu0 0
        %866 = vmatprep.subr.bf16.mxu0 0
        %867 = vmatpush1.bf16.msra.mxu0 0
        %868 = vmatprep.subr.bf16.mxu0 0
        %869 = vmatpush1.bf16.msra.mxu0 0
        %870 = vmatprep.subr.bf16.mxu0 0
        %871 = vmatpush1.bf16.msra.mxu0 0
        %872 = vmatprep.subr.bf16.mxu0 0
        %873 = vmatpush1.bf16.msra.mxu0 0
        %874 = vmatprep.subr.bf16.mxu0 0
        %875 = vmatpush1.bf16.msra.mxu0 0
        %876 = vmatprep.subr.bf16.mxu0 0
        %877 = vmatpush1.bf16.msra.mxu0 0
        %878 = vmatprep.mubr.bf16.mxu0 0
        %879 = vmatmul.mubr.bf16.gmra.mrb[0].mxu0 %v740
        %v880 = vpop.f32.mrb[0].mxu0
        %v881 = vadd.f32 %v718, %v880
        %v882 = vpop.f32.mrb[0].mxu0
        %v883 = vpop.f32.mrb[0].mxu0
        %v884 = vpop.f32.mrb[0].mxu0
        %885 = vdwg.mxu0
        %v890 = vunpack.c.l.b16 %v695
        %v891 = vunpack.c.l.b16 %v696
        %v892 = vunpack.c.l.b16 %v697
        %v893 = vunpack.c.l.b16 %v698
        %v894 = vpack.c.b16 %v891, %v890
        %v895 = vpack.c.b16 %v893, %v892
        %898 = vmatprep.subr.bf16.mxu0 0
        %899 = vmatpush1.bf16.msra.mxu0 %v894
        %900 = vmatprep.subr.bf16.mxu0 0
        %901 = vmatpush1.bf16.msra.mxu0 %v895
        %902 = vmatprep.subr.bf16.mxu0 0
        %903 = vmatpush1.bf16.msra.mxu0 0
        %904 = vmatprep.subr.bf16.mxu0 0
        %905 = vmatpush1.bf16.msra.mxu0 0
        %906 = vmatprep.subr.bf16.mxu0 0
        %907 = vmatpush1.bf16.msra.mxu0 0
        %908 = vmatprep.subr.bf16.mxu0 0
        %909 = vmatpush1.bf16.msra.mxu0 0
        %910 = vmatprep.subr.bf16.mxu0 0
        %911 = vmatpush1.bf16.msra.mxu0 0
        %912 = vmatprep.subr.bf16.mxu0 0
        %913 = vmatpush1.bf16.msra.mxu0 0
        %914 = vmatprep.subr.bf16.mxu0 0
        %915 = vmatpush1.bf16.msra.mxu0 0
        %916 = vmatprep.subr.bf16.mxu0 0
        %917 = vmatpush1.bf16.msra.mxu0 0
        %918 = vmatprep.subr.bf16.mxu0 0
        %919 = vmatpush1.bf16.msra.mxu0 0
        %920 = vmatprep.subr.bf16.mxu0 0
        %921 = vmatpush1.bf16.msra.mxu0 0
        %922 = vmatprep.subr.bf16.mxu0 0
        %923 = vmatpush1.bf16.msra.mxu0 0
        %924 = vmatprep.subr.bf16.mxu0 0
        %925 = vmatpush1.bf16.msra.mxu0 0
        %926 = vmatprep.subr.bf16.mxu0 0
        %927 = vmatpush1.bf16.msra.mxu0 0
        %928 = vmatprep.subr.bf16.mxu0 0
        %929 = vmatpush1.bf16.msra.mxu0 0
        %930 = vmatprep.mubr.bf16.mxu0 0
        %931 = vmatmul.mubr.bf16.gmra.mrb[0].mxu0 %v740
        %v932 = vpop.f32.mrb[0].mxu0
        %v933 = vadd.f32 %v722, %v932
        %v934 = vpop.f32.mrb[0].mxu0
        %v935 = vpop.f32.mrb[0].mxu0
        %v936 = vpop.f32.mrb[0].mxu0
        %937 = vdwg.mxu0
        %v938 = vpack.c.bf16 %v777, %v777
        %v939 = vpack.c.bf16 %v829, %v829
        %v940 = vpack.c.bf16 %v881, %v881
        %v941 = vpack.c.bf16 %v933, %v933
        %v942 = vld [vmem:[%s415] sm:$0xf]
        %v943 = vld [vmem:[%s7] sm:$0xf]
        %v944 = vld [vmem:[%s7 + $0x4] sm:$0xf]
        %v945 = vld [vmem:[%s7 + $0x8] sm:$0xf]
        %v946 = vld [vmem:[%s7 + $0xc] sm:$0xf]
        %v947 = vld [vmem:[%s7 + $0x10] sm:$0xf]
        %v948 = vld [vmem:[%s7 + $0x14] sm:$0xf]
        %v949 = vld [vmem:[%s7 + $0x18] sm:$0xf]
        %v950 = vld [vmem:[%s7 + $0x1c] sm:$0xf]
        %v951 = vld [vmem:[%s7 + $0x20] sm:$0xf]
        %v952 = vld [vmem:[%s7 + $0x24] sm:$0xf]
        %v953 = vld [vmem:[%s7 + $0x28] sm:$0xf]
        %v954 = vld [vmem:[%s7 + $0x2c] sm:$0xf]
        %v955 = vld [vmem:[%s7 + $0x30] sm:$0xf]
        %v956 = vld [vmem:[%s7 + $0x34] sm:$0xf]
        %v957 = vld [vmem:[%s7 + $0x38] sm:$0xf]
        %v958 = vld [vmem:[%s7 + $0x3c] sm:$0xf]
        %v959 = vld [vmem:[%s8] sm:$0x1]
        %v960 = vld [vmem:[%s8 + $0x1] sm:$0x1]
        %v961 = vld [vmem:[%s8 + $0x2] sm:$0x1]
        %v962 = vld [vmem:[%s8 + $0x3] sm:$0x1]
        %v967 = vlaneseq
        %v968 = vshrl.u32 %v967, 7
        %v969 = vsub.s32 0, %v968
        %v970 = vrot.slane %v959, %v969
        %v971 = vlaneseq
        %v972 = vshrl.u32 %v971, 7
        %v973 = vsub.s32 0, %v972
        %v974 = vrot.slane %v960, %v973
        %v975 = vlaneseq
        %v976 = vshrl.u32 %v975, 7
        %v977 = vsub.s32 0, %v976
        %v978 = vrot.slane %v961, %v977
        %v979 = vlaneseq
        %v980 = vshrl.u32 %v979, 7
        %v981 = vsub.s32 0, %v980
        %v982 = vrot.slane %v962, %v981
        %v991 = vunpack.c.l.b16 %v943
        %v992 = vunpack.c.l.b16 %v944
        %v993 = vunpack.c.l.b16 %v945
        %v994 = vunpack.c.l.b16 %v946
        %v995 = vpack.c.b16 %v992, %v991
        %v996 = vpack.c.b16 %v994, %v993
        %v1000 = vsel %vm474, %v942, 0
        %1002 = vmatprep.subr.bf16.mxu0 0
        %1003 = vmatpush1.bf16.msra.mxu0 %v995
        %1004 = vmatprep.subr.bf16.mxu0 0
        %1005 = vmatpush1.bf16.msra.mxu0 %v996
        %1006 = vmatprep.subr.bf16.mxu0 0
        %1007 = vmatpush1.bf16.msra.mxu0 0
        %1008 = vmatprep.subr.bf16.mxu0 0
        %1009 = vmatpush1.bf16.msra.mxu0 0
        %1010 = vmatprep.subr.bf16.mxu0 0
        %1011 = vmatpush1.bf16.msra.mxu0 0
        %1012 = vmatprep.subr.bf16.mxu0 0
        %1013 = vmatpush1.bf16.msra.mxu0 0
        %1014 = vmatprep.subr.bf16.mxu0 0
        %1015 = vmatpush1.bf16.msra.mxu0 0
        %1016 = vmatprep.subr.bf16.mxu0 0
        %1017 = vmatpush1.bf16.msra.mxu0 0
        %1018 = vmatprep.subr.bf16.mxu0 0
        %1019 = vmatpush1.bf16.msra.mxu0 0
        %1020 = vmatprep.subr.bf16.mxu0 0
        %1021 = vmatpush1.bf16.msra.mxu0 0
        %1022 = vmatprep.subr.bf16.mxu0 0
        %1023 = vmatpush1.bf16.msra.mxu0 0
        %1024 = vmatprep.subr.bf16.mxu0 0
        %1025 = vmatpush1.bf16.msra.mxu0 0
        %1026 = vmatprep.subr.bf16.mxu0 0
        %1027 = vmatpush1.bf16.msra.mxu0 0
        %1028 = vmatprep.subr.bf16.mxu0 0
        %1029 = vmatpush1.bf16.msra.mxu0 0
        %1030 = vmatprep.subr.bf16.mxu0 0
        %1031 = vmatpush1.bf16.msra.mxu0 0
        %1032 = vmatprep.subr.bf16.mxu0 0
        %1033 = vmatpush1.bf16.msra.mxu0 0
        %1034 = vmatprep.mubr.bf16.mxu0 0
        %1035 = vmatmul.mubr.bf16.gmra.mrb[0].mxu0 %v1000
        %v1036 = vpop.f32.mrb[0].mxu0
        %v1037 = vadd.f32 %v970, %v1036
        %v1038 = vpop.f32.mrb[0].mxu0
        %v1039 = vpop.f32.mrb[0].mxu0
        %v1040 = vpop.f32.mrb[0].mxu0
        %1041 = vdwg.mxu0
        %v1046 = vunpack.c.l.b16 %v947
        %v1047 = vunpack.c.l.b16 %v948
        %v1048 = vunpack.c.l.b16 %v949
        %v1049 = vunpack.c.l.b16 %v950
        %v1050 = vpack.c.b16 %v1047, %v1046
        %v1051 = vpack.c.b16 %v1049, %v1048
        %1054 = vmatprep.subr.bf16.mxu0 0
        %1055 = vmatpush1.bf16.msra.mxu0 %v1050
        %1056 = vmatprep.subr.bf16.mxu0 0
        %1057 = vmatpush1.bf16.msra.mxu0 %v1051
        %1058 = vmatprep.subr.bf16.mxu0 0
        %1059 = vmatpush1.bf16.msra.mxu0 0
        %1060 = vmatprep.subr.bf16.mxu0 0
        %1061 = vmatpush1.bf16.msra.mxu0 0
        %1062 = vmatprep.subr.bf16.mxu0 0
        %1063 = vmatpush1.bf16.msra.mxu0 0
        %1064 = vmatprep.subr.bf16.mxu0 0
        %1065 = vmatpush1.bf16.msra.mxu0 0
        %1066 = vmatprep.subr.bf16.mxu0 0
        %1067 = vmatpush1.bf16.msra.mxu0 0
        %1068 = vmatprep.subr.bf16.mxu0 0
        %1069 = vmatpush1.bf16.msra.mxu0 0
        %1070 = vmatprep.subr.bf16.mxu0 0
        %1071 = vmatpush1.bf16.msra.mxu0 0
        %1072 = vmatprep.subr.bf16.mxu0 0
        %1073 = vmatpush1.bf16.msra.mxu0 0
        %1074 = vmatprep.subr.bf16.mxu0 0
        %1075 = vmatpush1.bf16.msra.mxu0 0
        %1076 = vmatprep.subr.bf16.mxu0 0
        %1077 = vmatpush1.bf16.msra.mxu0 0
        %1078 = vmatprep.subr.bf16.mxu0 0
        %1079 = vmatpush1.bf16.msra.mxu0 0
        %1080 = vmatprep.subr.bf16.mxu0 0
        %1081 = vmatpush1.bf16.msra.mxu0 0
        %1082 = vmatprep.subr.bf16.mxu0 0
        %1083 = vmatpush1.bf16.msra.mxu0 0
        %1084 = vmatprep.subr.bf16.mxu0 0
        %1085 = vmatpush1.bf16.msra.mxu0 0
        %1086 = vmatprep.mubr.bf16.mxu0 0
        %1087 = vmatmul.mubr.bf16.gmra.mrb[0].mxu0 %v1000
        %v1088 = vpop.f32.mrb[0].mxu0
        %v1089 = vadd.f32 %v974, %v1088
        %v1090 = vpop.f32.mrb[0].mxu0
        %v1091 = vpop.f32.mrb[0].mxu0
        %v1092 = vpop.f32.mrb[0].mxu0
        %1093 = vdwg.mxu0
        %v1098 = vunpack.c.l.b16 %v951
        %v1099 = vunpack.c.l.b16 %v952
        %v1100 = vunpack.c.l.b16 %v953
        %v1101 = vunpack.c.l.b16 %v954
        %v1102 = vpack.c.b16 %v1099, %v1098
        %v1103 = vpack.c.b16 %v1101, %v1100
        %1106 = vmatprep.subr.bf16.mxu0 0
        %1107 = vmatpush1.bf16.msra.mxu0 %v1102
        %1108 = vmatprep.subr.bf16.mxu0 0
        %1109 = vmatpush1.bf16.msra.mxu0 %v1103
        %1110 = vmatprep.subr.bf16.mxu0 0
        %1111 = vmatpush1.bf16.msra.mxu0 0
        %1112 = vmatprep.subr.bf16.mxu0 0
        %1113 = vmatpush1.bf16.msra.mxu0 0
        %1114 = vmatprep.subr.bf16.mxu0 0
        %1115 = vmatpush1.bf16.msra.mxu0 0
        %1116 = vmatprep.subr.bf16.mxu0 0
        %1117 = vmatpush1.bf16.msra.mxu0 0
        %1118 = vmatprep.subr.bf16.mxu0 0
        %1119 = vmatpush1.bf16.msra.mxu0 0
        %1120 = vmatprep.subr.bf16.mxu0 0
        %1121 = vmatpush1.bf16.msra.mxu0 0
        %1122 = vmatprep.subr.bf16.mxu0 0
        %1123 = vmatpush1.bf16.msra.mxu0 0
        %1124 = vmatprep.subr.bf16.mxu0 0
        %1125 = vmatpush1.bf16.msra.mxu0 0
        %1126 = vmatprep.subr.bf16.mxu0 0
        %1127 = vmatpush1.bf16.msra.mxu0 0
        %1128 = vmatprep.subr.bf16.mxu0 0
        %1129 = vmatpush1.bf16.msra.mxu0 0
        %1130 = vmatprep.subr.bf16.mxu0 0
        %1131 = vmatpush1.bf16.msra.mxu0 0
        %1132 = vmatprep.subr.bf16.mxu0 0
        %1133 = vmatpush1.bf16.msra.mxu0 0
        %1134 = vmatprep.subr.bf16.mxu0 0
        %1135 = vmatpush1.bf16.msra.mxu0 0
        %1136 = vmatprep.subr.bf16.mxu0 0
        %1137 = vmatpush1.bf16.msra.mxu0 0
        %1138 = vmatprep.mubr.bf16.mxu0 0
        %1139 = vmatmul.mubr.bf16.gmra.mrb[0].mxu0 %v1000
        %v1140 = vpop.f32.mrb[0].mxu0
        %v1141 = vadd.f32 %v978, %v1140
        %v1142 = vpop.f32.mrb[0].mxu0
        %v1143 = vpop.f32.mrb[0].mxu0
        %v1144 = vpop.f32.mrb[0].mxu0
        %1145 = vdwg.mxu0
        %v1150 = vunpack.c.l.b16 %v955
        %v1151 = vunpack.c.l.b16 %v956
        %v1152 = vunpack.c.l.b16 %v957
        %v1153 = vunpack.c.l.b16 %v958
        %v1154 = vpack.c.b16 %v1151, %v1150
        %v1155 = vpack.c.b16 %v1153, %v1152
        %1158 = vmatprep.subr.bf16.mxu0 0
        %1159 = vmatpush1.bf16.msra.mxu0 %v1154
        %1160 = vmatprep.subr.bf16.mxu0 0
        %1161 = vmatpush1.bf16.msra.mxu0 %v1155
        %1162 = vmatprep.subr.bf16.mxu0 0
        %1163 = vmatpush1.bf16.msra.mxu0 0
        %1164 = vmatprep.subr.bf16.mxu0 0
        %1165 = vmatpush1.bf16.msra.mxu0 0
        %1166 = vmatprep.subr.bf16.mxu0 0
        %1167 = vmatpush1.bf16.msra.mxu0 0
        %1168 = vmatprep.subr.bf16.mxu0 0
        %1169 = vmatpush1.bf16.msra.mxu0 0
        %1170 = vmatprep.subr.bf16.mxu0 0
        %1171 = vmatpush1.bf16.msra.mxu0 0
        %1172 = vmatprep.subr.bf16.mxu0 0
        %1173 = vmatpush1.bf16.msra.mxu0 0
        %1174 = vmatprep.subr.bf16.mxu0 0
        %1175 = vmatpush1.bf16.msra.mxu0 0
        %1176 = vmatprep.subr.bf16.mxu0 0
        %1177 = vmatpush1.bf16.msra.mxu0 0
        %1178 = vmatprep.subr.bf16.mxu0 0
        %1179 = vmatpush1.bf16.msra.mxu0 0
        %1180 = vmatprep.subr.bf16.mxu0 0
        %1181 = vmatpush1.bf16.msra.mxu0 0
        %1182 = vmatprep.subr.bf16.mxu0 0
        %1183 = vmatpush1.bf16.msra.mxu0 0
        %1184 = vmatprep.subr.bf16.mxu0 0
        %1185 = vmatpush1.bf16.msra.mxu0 0
        %1186 = vmatprep.subr.bf16.mxu0 0
        %1187 = vmatpush1.bf16.msra.mxu0 0
        %1188 = vmatprep.subr.bf16.mxu0 0
        %1189 = vmatpush1.bf16.msra.mxu0 0
        %1190 = vmatprep.mubr.bf16.mxu0 0
        %1191 = vmatmul.mubr.bf16.gmra.mrb[0].mxu0 %v1000
        %v1192 = vpop.f32.mrb[0].mxu0
        %v1193 = vadd.f32 %v982, %v1192
        %v1194 = vpop.f32.mrb[0].mxu0
        %v1195 = vpop.f32.mrb[0].mxu0
        %v1196 = vpop.f32.mrb[0].mxu0
        %1197 = vdwg.mxu0
        %v1198 = vpack.c.bf16 %v1037, %v1037
        %v1199 = vpack.c.bf16 %v1089, %v1089
        %v1200 = vpack.c.bf16 %v1141, %v1141
        %v1201 = vpack.c.bf16 %v1193, %v1193
        %vm1202 = vcmask 64512
        %v1204 = vsel %vm1202, %v678, 0
        %v1207 = vsel %vm1202, %v938, 0
        %1209 = vmatprep.subr.bf16.mxu0 0
        %1210 = vmatpush1.bf16.xpose.msra.mxu0 %v1207
        %1211 = vmatprep.subr.bf16.mxu0 0
        %1212 = vmatpush1.bf16.xpose.msra.mxu0 0
        %1213 = vmatprep.subr.bf16.mxu0 0
        %1214 = vmatpush1.bf16.xpose.msra.mxu0 0
        %1215 = vmatprep.subr.bf16.mxu0 0
        %1216 = vmatpush1.bf16.xpose.msra.mxu0 0
        %1217 = vmatprep.subr.bf16.mxu0 0
        %1218 = vmatpush1.bf16.xpose.msra.mxu0 0
        %1219 = vmatprep.subr.bf16.mxu0 0
        %1220 = vmatpush1.bf16.xpose.msra.mxu0 0
        %1221 = vmatprep.subr.bf16.mxu0 0
        %1222 = vmatpush1.bf16.xpose.msra.mxu0 0
        %1223 = vmatprep.subr.bf16.mxu0 0
        %1224 = vmatpush1.bf16.xpose.msra.mxu0 0
        %1225 = vmatprep.subr.bf16.mxu0 0
        %1226 = vmatpush1.bf16.xpose.msra.mxu0 0
        %1227 = vmatprep.subr.bf16.mxu0 0
        %1228 = vmatpush1.bf16.xpose.msra.mxu0 0
        %1229 = vmatprep.subr.bf16.mxu0 0
        %1230 = vmatpush1.bf16.xpose.msra.mxu0 0
        %1231 = vmatprep.subr.bf16.mxu0 0
        %1232 = vmatpush1.bf16.xpose.msra.mxu0 0
        %1233 = vmatprep.subr.bf16.mxu0 0
        %1234 = vmatpush1.bf16.xpose.msra.mxu0 0
        %1235 = vmatprep.subr.bf16.mxu0 0
        %1236 = vmatpush1.bf16.xpose.msra.mxu0 0
        %1237 = vmatprep.subr.bf16.mxu0 0
        %1238 = vmatpush1.bf16.xpose.msra.mxu0 0
        %1239 = vmatprep.subr.bf16.mxu0 0
        %1240 = vmatpush1.bf16.xpose.msra.mxu0 0
        %1241 = vmatprep.mubr.bf16.mxu0 0
        %1242 = vmatmul.mubr.bf16.gmra.mrb[0].mxu0 %v1204
        %v1243 = vpop.f32.mrb[0].mxu0
        %v1244 = vadd.f32 0.0, %v1243
        %v1245 = vpop.f32.mrb[0].mxu0
        %v1246 = vpop.f32.mrb[0].mxu0
        %v1247 = vpop.f32.mrb[0].mxu0
        %1248 = vdwg.mxu0
        %v1250 = vsel %vm1202, %v679, 0
        %v1253 = vsel %vm1202, %v939, 0
        %1255 = vmatprep.subr.bf16.mxu0 0
        %1256 = vmatpush1.bf16.xpose.msra.mxu0 %v1253
        %1257 = vmatprep.subr.bf16.mxu0 0
        %1258 = vmatpush1.bf16.xpose.msra.mxu0 0
        %1259 = vmatprep.subr.bf16.mxu0 0
        %1260 = vmatpush1.bf16.xpose.msra.mxu0 0
        %1261 = vmatprep.subr.bf16.mxu0 0
        %1262 = vmatpush1.bf16.xpose.msra.mxu0 0
        %1263 = vmatprep.subr.bf16.mxu0 0
        %1264 = vmatpush1.bf16.xpose.msra.mxu0 0
        %1265 = vmatprep.subr.bf16.mxu0 0
        %1266 = vmatpush1.bf16.xpose.msra.mxu0 0
        %1267 = vmatprep.subr.bf16.mxu0 0
        %1268 = vmatpush1.bf16.xpose.msra.mxu0 0
        %1269 = vmatprep.subr.bf16.mxu0 0
        %1270 = vmatpush1.bf16.xpose.msra.mxu0 0
        %1271 = vmatprep.subr.bf16.mxu0 0
        %1272 = vmatpush1.bf16.xpose.msra.mxu0 0
        %1273 = vmatprep.subr.bf16.mxu0 0
        %1274 = vmatpush1.bf16.xpose.msra.mxu0 0
        %1275 = vmatprep.subr.bf16.mxu0 0
        %1276 = vmatpush1.bf16.xpose.msra.mxu0 0
        %1277 = vmatprep.subr.bf16.mxu0 0
        %1278 = vmatpush1.bf16.xpose.msra.mxu0 0
        %1279 = vmatprep.subr.bf16.mxu0 0
        %1280 = vmatpush1.bf16.xpose.msra.mxu0 0
        %1281 = vmatprep.subr.bf16.mxu0 0
        %1282 = vmatpush1.bf16.xpose.msra.mxu0 0
        %1283 = vmatprep.subr.bf16.mxu0 0
        %1284 = vmatpush1.bf16.xpose.msra.mxu0 0
        %1285 = vmatprep.subr.bf16.mxu0 0
        %1286 = vmatpush1.bf16.xpose.msra.mxu0 0
        %1287 = vmatprep.mubr.bf16.mxu0 0
        %1288 = vmatmul.mubr.bf16.gmra.mrb[0].mxu0 %v1250
        %v1289 = vpop.f32.mrb[0].mxu0
        %v1290 = vadd.f32 0.0, %v1289
        %v1291 = vpop.f32.mrb[0].mxu0
        %v1292 = vpop.f32.mrb[0].mxu0
        %v1293 = vpop.f32.mrb[0].mxu0
        %1294 = vdwg.mxu0
        %v1296 = vsel %vm1202, %v680, 0
        %v1299 = vsel %vm1202, %v940, 0
        %1301 = vmatprep.subr.bf16.mxu0 0
        %1302 = vmatpush1.bf16.xpose.msra.mxu0 %v1299
        %1303 = vmatprep.subr.bf16.mxu0 0
        %1304 = vmatpush1.bf16.xpose.msra.mxu0 0
        %1305 = vmatprep.subr.bf16.mxu0 0
        %1306 = vmatpush1.bf16.xpose.msra.mxu0 0
        %1307 = vmatprep.subr.bf16.mxu0 0
        %1308 = vmatpush1.bf16.xpose.msra.mxu0 0
        %1309 = vmatprep.subr.bf16.mxu0 0
        %1310 = vmatpush1.bf16.xpose.msra.mxu0 0
        %1311 = vmatprep.subr.bf16.mxu0 0
        %1312 = vmatpush1.bf16.xpose.msra.mxu0 0
        %1313 = vmatprep.subr.bf16.mxu0 0
        %1314 = vmatpush1.bf16.xpose.msra.mxu0 0
        %1315 = vmatprep.subr.bf16.mxu0 0
        %1316 = vmatpush1.bf16.xpose.msra.mxu0 0
        %1317 = vmatprep.subr.bf16.mxu0 0
        %1318 = vmatpush1.bf16.xpose.msra.mxu0 0
        %1319 = vmatprep.subr.bf16.mxu0 0
        %1320 = vmatpush1.bf16.xpose.msra.mxu0 0
        %1321 = vmatprep.subr.bf16.mxu0 0
        %1322 = vmatpush1.bf16.xpose.msra.mxu0 0
        %1323 = vmatprep.subr.bf16.mxu0 0
        %1324 = vmatpush1.bf16.xpose.msra.mxu0 0
        %1325 = vmatprep.subr.bf16.mxu0 0
        %1326 = vmatpush1.bf16.xpose.msra.mxu0 0
        %1327 = vmatprep.subr.bf16.mxu0 0
        %1328 = vmatpush1.bf16.xpose.msra.mxu0 0
        %1329 = vmatprep.subr.bf16.mxu0 0
        %1330 = vmatpush1.bf16.xpose.msra.mxu0 0
        %1331 = vmatprep.subr.bf16.mxu0 0
        %1332 = vmatpush1.bf16.xpose.msra.mxu0 0
        %1333 = vmatprep.mubr.bf16.mxu0 0
        %1334 = vmatmul.mubr.bf16.gmra.mrb[0].mxu0 %v1296
        %v1335 = vpop.f32.mrb[0].mxu0
        %v1336 = vadd.f32 0.0, %v1335
        %v1337 = vpop.f32.mrb[0].mxu0
        %v1338 = vpop.f32.mrb[0].mxu0
        %v1339 = vpop.f32.mrb[0].mxu0
        %1340 = vdwg.mxu0
        %v1342 = vsel %vm1202, %v681, 0
        %v1345 = vsel %vm1202, %v941, 0
        %1347 = vmatprep.subr.bf16.mxu0 0
        %1348 = vmatpush1.bf16.xpose.msra.mxu0 %v1345
        %1349 = vmatprep.subr.bf16.mxu0 0
        %1350 = vmatpush1.bf16.xpose.msra.mxu0 0
        %1351 = vmatprep.subr.bf16.mxu0 0
        %1352 = vmatpush1.bf16.xpose.msra.mxu0 0
        %1353 = vmatprep.subr.bf16.mxu0 0
        %1354 = vmatpush1.bf16.xpose.msra.mxu0 0
        %1355 = vmatprep.subr.bf16.mxu0 0
        %1356 = vmatpush1.bf16.xpose.msra.mxu0 0
        %1357 = vmatprep.subr.bf16.mxu0 0
        %1358 = vmatpush1.bf16.xpose.msra.mxu0 0
        %1359 = vmatprep.subr.bf16.mxu0 0
        %1360 = vmatpush1.bf16.xpose.msra.mxu0 0
        %1361 = vmatprep.subr.bf16.mxu0 0
        %1362 = vmatpush1.bf16.xpose.msra.mxu0 0
        %1363 = vmatprep.subr.bf16.mxu0 0
        %1364 = vmatpush1.bf16.xpose.msra.mxu0 0
        %1365 = vmatprep.subr.bf16.mxu0 0
        %1366 = vmatpush1.bf16.xpose.msra.mxu0 0
        %1367 = vmatprep.subr.bf16.mxu0 0
        %1368 = vmatpush1.bf16.xpose.msra.mxu0 0
        %1369 = vmatprep.subr.bf16.mxu0 0
        %1370 = vmatpush1.bf16.xpose.msra.mxu0 0
        %1371 = vmatprep.subr.bf16.mxu0 0
        %1372 = vmatpush1.bf16.xpose.msra.mxu0 0
        %1373 = vmatprep.subr.bf16.mxu0 0
        %1374 = vmatpush1.bf16.xpose.msra.mxu0 0
        %1375 = vmatprep.subr.bf16.mxu0 0
        %1376 = vmatpush1.bf16.xpose.msra.mxu0 0
        %1377 = vmatprep.subr.bf16.mxu0 0
        %1378 = vmatpush1.bf16.xpose.msra.mxu0 0
        %1379 = vmatprep.mubr.bf16.mxu0 0
        %1380 = vmatmul.mubr.bf16.gmra.mrb[0].mxu0 %v1342
        %v1381 = vpop.f32.mrb[0].mxu0
        %v1382 = vadd.f32 0.0, %v1381
        %v1383 = vpop.f32.mrb[0].mxu0
        %v1384 = vpop.f32.mrb[0].mxu0
        %v1385 = vpop.f32.mrb[0].mxu0
        %1386 = vdwg.mxu0
        %v1387 = vsel %vm1202, %v1244, -inf
        %1388 = vmax.xlane.f32.xlu0 %v1387
        %v1389 = vpop.xlane.xlu0 %1388
        %v1390 = vsel %vm1202, %v1290, -inf
        %1391 = vmax.xlane.f32.xlu0 %v1390
        %v1392 = vpop.xlane.xlu0 %1391
        %v1393 = vsel %vm1202, %v1336, -inf
        %1394 = vmax.xlane.f32.xlu0 %v1393
        %v1395 = vpop.xlane.xlu0 %1394
        %v1396 = vsel %vm1202, %v1382, -inf
        %1397 = vmax.xlane.f32.xlu0 %v1396
        %v1398 = vpop.xlane.xlu0 %1397
        %v1399 = vsub.f32 %v1244, %v1389
        %v1400 = vsub.f32 %v1290, %v1392
        %v1401 = vsub.f32 %v1336, %v1395
        %v1402 = vsub.f32 %v1382, %v1398
        %v1403 = vmul.f32 %v1399, 1.442695
        %v1404 = vpow.pop %v1403
        %v1405 = vmul.f32 %v1400, 1.442695
        %v1406 = vpow.pop %v1405
        %v1407 = vmul.f32 %v1401, 1.442695
        %v1408 = vpow.pop %v1407
        %v1409 = vmul.f32 %v1402, 1.442695
        %v1410 = vpow.pop %v1409
        %v1411 = vsel %vm1202, %v1404, 0.0
        %1412 = vadd.xlane.f32.xlu0 %v1411
        %v1413 = vpop.xlane.xlu0 %1412
        %v1414 = vsel %vm1202, %v1406, 0.0
        %1415 = vadd.xlane.f32.xlu0 %v1414
        %v1416 = vpop.xlane.xlu0 %1415
        %v1417 = vsel %vm1202, %v1408, 0.0
        %1418 = vadd.xlane.f32.xlu0 %v1417
        %v1419 = vpop.xlane.xlu0 %1418
        %v1420 = vsel %vm1202, %v1410, 0.0
        %1421 = vadd.xlane.f32.xlu0 %v1420
        %v1422 = vpop.xlane.xlu0 %1421
        %v1423 = vrcp.pop %v1413
        %v1424 = vrcp.pop %v1416
        %v1425 = vrcp.pop %v1419
        %v1426 = vrcp.pop %v1422
        %v1427 = vmul.f32 %v1404, %v1423
        %v1428 = vmul.f32 %v1406, %v1424
        %v1429 = vmul.f32 %v1408, %v1425
        %v1430 = vmul.f32 %v1410, %v1426
        %v1431 = vpack.c.bf16 %v1427, %v1427
        %v1432 = vpack.c.bf16 %v1428, %v1428
        %v1433 = vpack.c.bf16 %v1429, %v1429
        %v1434 = vpack.c.bf16 %v1430, %v1430
        %v1436 = vsel %vm1202, %v1431, 0
        %vm1438 = vcmask 1043456
        %v1440 = vsel %vm1438, %v1198, 0
        %1442 = vmatprep.subr.bf16.mxu0 0
        %1443 = vmatpush1.bf16.msra.mxu0 %v1440
        %1444 = vmatprep.subr.bf16.mxu0 0
        %1445 = vmatpush1.bf16.msra.mxu0 0
        %1446 = vmatprep.subr.bf16.mxu0 0
        %1447 = vmatpush1.bf16.msra.mxu0 0
        %1448 = vmatprep.subr.bf16.mxu0 0
        %1449 = vmatpush1.bf16.msra.mxu0 0
        %1450 = vmatprep.subr.bf16.mxu0 0
        %1451 = vmatpush1.bf16.msra.mxu0 0
        %1452 = vmatprep.subr.bf16.mxu0 0
        %1453 = vmatpush1.bf16.msra.mxu0 0
        %1454 = vmatprep.subr.bf16.mxu0 0
        %1455 = vmatpush1.bf16.msra.mxu0 0
        %1456 = vmatprep.subr.bf16.mxu0 0
        %1457 = vmatpush1.bf16.msra.mxu0 0
        %1458 = vmatprep.subr.bf16.mxu0 0
        %1459 = vmatpush1.bf16.msra.mxu0 0
        %1460 = vmatprep.subr.bf16.mxu0 0
        %1461 = vmatpush1.bf16.msra.mxu0 0
        %1462 = vmatprep.subr.bf16.mxu0 0
        %1463 = vmatpush1.bf16.msra.mxu0 0
        %1464 = vmatprep.subr.bf16.mxu0 0
        %1465 = vmatpush1.bf16.msra.mxu0 0
        %1466 = vmatprep.subr.bf16.mxu0 0
        %1467 = vmatpush1.bf16.msra.mxu0 0
        %1468 = vmatprep.subr.bf16.mxu0 0
        %1469 = vmatpush1.bf16.msra.mxu0 0
        %1470 = vmatprep.subr.bf16.mxu0 0
        %1471 = vmatpush1.bf16.msra.mxu0 0
        %1472 = vmatprep.subr.bf16.mxu0 0
        %1473 = vmatpush1.bf16.msra.mxu0 0
        %1474 = vmatprep.mubr.bf16.mxu0 0
        %1475 = vmatmul.mubr.bf16.gmra.mrb[0].mxu0 %v1436
        %v1476 = vpop.f32.mrb[0].mxu0
        %v1477 = vadd.f32 0.0, %v1476
        %v1478 = vpop.f32.mrb[0].mxu0
        %v1479 = vpop.f32.mrb[0].mxu0
        %v1480 = vpop.f32.mrb[0].mxu0
        %1481 = vdwg.mxu0
        %v1483 = vsel %vm1202, %v1432, 0
        %v1486 = vsel %vm1438, %v1199, 0
        %1488 = vmatprep.subr.bf16.mxu0 0
        %1489 = vmatpush1.bf16.msra.mxu0 %v1486
        %1490 = vmatprep.subr.bf16.mxu0 0
        %1491 = vmatpush1.bf16.msra.mxu0 0
        %1492 = vmatprep.subr.bf16.mxu0 0
        %1493 = vmatpush1.bf16.msra.mxu0 0
        %1494 = vmatprep.subr.bf16.mxu0 0
        %1495 = vmatpush1.bf16.msra.mxu0 0
        %1496 = vmatprep.subr.bf16.mxu0 0
        %1497 = vmatpush1.bf16.msra.mxu0 0
        %1498 = vmatprep.subr.bf16.mxu0 0
        %1499 = vmatpush1.bf16.msra.mxu0 0
        %1500 = vmatprep.subr.bf16.mxu0 0
        %1501 = vmatpush1.bf16.msra.mxu0 0
        %1502 = vmatprep.subr.bf16.mxu0 0
        %1503 = vmatpush1.bf16.msra.mxu0 0
        %1504 = vmatprep.subr.bf16.mxu0 0
        %1505 = vmatpush1.bf16.msra.mxu0 0
        %1506 = vmatprep.subr.bf16.mxu0 0
        %1507 = vmatpush1.bf16.msra.mxu0 0
        %1508 = vmatprep.subr.bf16.mxu0 0
        %1509 = vmatpush1.bf16.msra.mxu0 0
        %1510 = vmatprep.subr.bf16.mxu0 0
        %1511 = vmatpush1.bf16.msra.mxu0 0
        %1512 = vmatprep.subr.bf16.mxu0 0
        %1513 = vmatpush1.bf16.msra.mxu0 0
        %1514 = vmatprep.subr.bf16.mxu0 0
        %1515 = vmatpush1.bf16.msra.mxu0 0
        %1516 = vmatprep.subr.bf16.mxu0 0
        %1517 = vmatpush1.bf16.msra.mxu0 0
        %1518 = vmatprep.subr.bf16.mxu0 0
        %1519 = vmatpush1.bf16.msra.mxu0 0
        %1520 = vmatprep.mubr.bf16.mxu0 0
        %1521 = vmatmul.mubr.bf16.gmra.mrb[0].mxu0 %v1483
        %v1522 = vpop.f32.mrb[0].mxu0
        %v1523 = vadd.f32 0.0, %v1522
        %v1524 = vpop.f32.mrb[0].mxu0
        %v1525 = vpop.f32.mrb[0].mxu0
        %v1526 = vpop.f32.mrb[0].mxu0
        %1527 = vdwg.mxu0
        %v1529 = vsel %vm1202, %v1433, 0
        %v1532 = vsel %vm1438, %v1200, 0
        %1534 = vmatprep.subr.bf16.mxu0 0
        %1535 = vmatpush1.bf16.msra.mxu0 %v1532
        %1536 = vmatprep.subr.bf16.mxu0 0
        %1537 = vmatpush1.bf16.msra.mxu0 0
        %1538 = vmatprep.subr.bf16.mxu0 0
        %1539 = vmatpush1.bf16.msra.mxu0 0
        %1540 = vmatprep.subr.bf16.mxu0 0
        %1541 = vmatpush1.bf16.msra.mxu0 0
        %1542 = vmatprep.subr.bf16.mxu0 0
        %1543 = vmatpush1.bf16.msra.mxu0 0
        %1544 = vmatprep.subr.bf16.mxu0 0
        %1545 = vmatpush1.bf16.msra.mxu0 0
        %1546 = vmatprep.subr.bf16.mxu0 0
        %1547 = vmatpush1.bf16.msra.mxu0 0
        %1548 = vmatprep.subr.bf16.mxu0 0
        %1549 = vmatpush1.bf16.msra.mxu0 0
        %1550 = vmatprep.subr.bf16.mxu0 0
        %1551 = vmatpush1.bf16.msra.mxu0 0
        %1552 = vmatprep.subr.bf16.mxu0 0
        %1553 = vmatpush1.bf16.msra.mxu0 0
        %1554 = vmatprep.subr.bf16.mxu0 0
        %1555 = vmatpush1.bf16.msra.mxu0 0
        %1556 = vmatprep.subr.bf16.mxu0 0
        %1557 = vmatpush1.bf16.msra.mxu0 0
        %1558 = vmatprep.subr.bf16.mxu0 0
        %1559 = vmatpush1.bf16.msra.mxu0 0
        %1560 = vmatprep.subr.bf16.mxu0 0
        %1561 = vmatpush1.bf16.msra.mxu0 0
        %1562 = vmatprep.subr.bf16.mxu0 0
        %1563 = vmatpush1.bf16.msra.mxu0 0
        %1564 = vmatprep.subr.bf16.mxu0 0
        %1565 = vmatpush1.bf16.msra.mxu0 0
        %1566 = vmatprep.mubr.bf16.mxu0 0
        %1567 = vmatmul.mubr.bf16.gmra.mrb[0].mxu0 %v1529
        %v1568 = vpop.f32.mrb[0].mxu0
        %v1569 = vadd.f32 0.0, %v1568
        %v1570 = vpop.f32.mrb[0].mxu0
        %v1571 = vpop.f32.mrb[0].mxu0
        %v1572 = vpop.f32.mrb[0].mxu0
        %1573 = vdwg.mxu0
        %v1575 = vsel %vm1202, %v1434, 0
        %v1578 = vsel %vm1438, %v1201, 0
        %1580 = vmatprep.subr.bf16.mxu0 0
        %1581 = vmatpush1.bf16.msra.mxu0 %v1578
        %1582 = vmatprep.subr.bf16.mxu0 0
        %1583 = vmatpush1.bf16.msra.mxu0 0
        %1584 = vmatprep.subr.bf16.mxu0 0
        %1585 = vmatpush1.bf16.msra.mxu0 0
        %1586 = vmatprep.subr.bf16.mxu0 0
        %1587 = vmatpush1.bf16.msra.mxu0 0
        %1588 = vmatprep.subr.bf16.mxu0 0
        %1589 = vmatpush1.bf16.msra.mxu0 0
        %1590 = vmatprep.subr.bf16.mxu0 0
        %1591 = vmatpush1.bf16.msra.mxu0 0
        %1592 = vmatprep.subr.bf16.mxu0 0
        %1593 = vmatpush1.bf16.msra.mxu0 0
        %1594 = vmatprep.subr.bf16.mxu0 0
        %1595 = vmatpush1.bf16.msra.mxu0 0
        %1596 = vmatprep.subr.bf16.mxu0 0
        %1597 = vmatpush1.bf16.msra.mxu0 0
        %1598 = vmatprep.subr.bf16.mxu0 0
        %1599 = vmatpush1.bf16.msra.mxu0 0
        %1600 = vmatprep.subr.bf16.mxu0 0
        %1601 = vmatpush1.bf16.msra.mxu0 0
        %1602 = vmatprep.subr.bf16.mxu0 0
        %1603 = vmatpush1.bf16.msra.mxu0 0
        %1604 = vmatprep.subr.bf16.mxu0 0
        %1605 = vmatpush1.bf16.msra.mxu0 0
        %1606 = vmatprep.subr.bf16.mxu0 0
        %1607 = vmatpush1.bf16.msra.mxu0 0
        %1608 = vmatprep.subr.bf16.mxu0 0
        %1609 = vmatpush1.bf16.msra.mxu0 0
        %1610 = vmatprep.subr.bf16.mxu0 0
        %1611 = vmatpush1.bf16.msra.mxu0 0
        %1612 = vmatprep.mubr.bf16.mxu0 0
        %1613 = vmatmul.mubr.bf16.gmra.mrb[0].mxu0 %v1575
        %v1614 = vpop.f32.mrb[0].mxu0
        %v1615 = vadd.f32 0.0, %v1614
        %v1616 = vpop.f32.mrb[0].mxu0
        %v1617 = vpop.f32.mrb[0].mxu0
        %v1618 = vpop.f32.mrb[0].mxu0
        %1619 = vdwg.mxu0
        %v1620 = vpack.c.bf16 %v1477, %v1477
        %v1621 = vpack.c.bf16 %v1523, %v1523
        %v1622 = vpack.c.bf16 %v1569, %v1569
        %v1623 = vpack.c.bf16 %v1615, %v1615
        %v1624 = vld [vmem:[%s9] sm:$0xf]
        %v1625 = vld [vmem:[%s9 + $0x4] sm:$0xf]
        %v1626 = vld [vmem:[%s9 + $0x8] sm:$0xf]
        %v1627 = vld [vmem:[%s9 + $0xc] sm:$0xf]
        %v1629 = vsel %vm1202, %v1620, 0
        %v1632 = vsel %vm1438, %v1624, 0
        %1634 = vmatprep.subr.bf16.mxu0 0
        %1635 = vmatpush1.bf16.msra.mxu0 %v1632
        %1636 = vmatprep.subr.bf16.mxu0 0
        %1637 = vmatpush1.bf16.msra.mxu0 0
        %1638 = vmatprep.subr.bf16.mxu0 0
        %1639 = vmatpush1.bf16.msra.mxu0 0
        %1640 = vmatprep.subr.bf16.mxu0 0
        %1641 = vmatpush1.bf16.msra.mxu0 0
        %1642 = vmatprep.subr.bf16.mxu0 0
        %1643 = vmatpush1.bf16.msra.mxu0 0
        %1644 = vmatprep.subr.bf16.mxu0 0
        %1645 = vmatpush1.bf16.msra.mxu0 0
        %1646 = vmatprep.subr.bf16.mxu0 0
        %1647 = vmatpush1.bf16.msra.mxu0 0
        %1648 = vmatprep.subr.bf16.mxu0 0
        %1649 = vmatpush1.bf16.msra.mxu0 0
        %1650 = vmatprep.subr.bf16.mxu0 0
        %1651 = vmatpush1.bf16.msra.mxu0 0
        %1652 = vmatprep.subr.bf16.mxu0 0
        %1653 = vmatpush1.bf16.msra.mxu0 0
        %1654 = vmatprep.subr.bf16.mxu0 0
        %1655 = vmatpush1.bf16.msra.mxu0 0
        %1656 = vmatprep.subr.bf16.mxu0 0
        %1657 = vmatpush1.bf16.msra.mxu0 0
        %1658 = vmatprep.subr.bf16.mxu0 0
        %1659 = vmatpush1.bf16.msra.mxu0 0
        %1660 = vmatprep.subr.bf16.mxu0 0
        %1661 = vmatpush1.bf16.msra.mxu0 0
        %1662 = vmatprep.subr.bf16.mxu0 0
        %1663 = vmatpush1.bf16.msra.mxu0 0
        %1664 = vmatprep.subr.bf16.mxu0 0
        %1665 = vmatpush1.bf16.msra.mxu0 0
        %1666 = vmatprep.mubr.bf16.mxu0 0
        %1667 = vmatmul.mubr.bf16.gmra.mrb[0].mxu0 %v1629
        %v1668 = vpop.f32.mrb[0].mxu0
        %v1669 = vadd.f32 0.0, %v1668
        %v1670 = vpop.f32.mrb[0].mxu0
        %v1671 = vpop.f32.mrb[0].mxu0
        %v1672 = vpop.f32.mrb[0].mxu0
        %1673 = vdwg.mxu0
        %v1675 = vsel %vm1202, %v1621, 0
        %v1678 = vsel %vm1438, %v1625, 0
        %1680 = vmatprep.subr.bf16.mxu0 0
        %1681 = vmatpush1.bf16.msra.mxu0 %v1678
        %1682 = vmatprep.subr.bf16.mxu0 0
        %1683 = vmatpush1.bf16.msra.mxu0 0
        %1684 = vmatprep.subr.bf16.mxu0 0
        %1685 = vmatpush1.bf16.msra.mxu0 0
        %1686 = vmatprep.subr.bf16.mxu0 0
        %1687 = vmatpush1.bf16.msra.mxu0 0
        %1688 = vmatprep.subr.bf16.mxu0 0
        %1689 = vmatpush1.bf16.msra.mxu0 0
        %1690 = vmatprep.subr.bf16.mxu0 0
        %1691 = vmatpush1.bf16.msra.mxu0 0
        %1692 = vmatprep.subr.bf16.mxu0 0
        %1693 = vmatpush1.bf16.msra.mxu0 0
        %1694 = vmatprep.subr.bf16.mxu0 0
        %1695 = vmatpush1.bf16.msra.mxu0 0
        %1696 = vmatprep.subr.bf16.mxu0 0
        %1697 = vmatpush1.bf16.msra.mxu0 0
        %1698 = vmatprep.subr.bf16.mxu0 0
        %1699 = vmatpush1.bf16.msra.mxu0 0
        %1700 = vmatprep.subr.bf16.mxu0 0
        %1701 = vmatpush1.bf16.msra.mxu0 0
        %1702 = vmatprep.subr.bf16.mxu0 0
        %1703 = vmatpush1.bf16.msra.mxu0 0
        %1704 = vmatprep.subr.bf16.mxu0 0
        %1705 = vmatpush1.bf16.msra.mxu0 0
        %1706 = vmatprep.subr.bf16.mxu0 0
        %1707 = vmatpush1.bf16.msra.mxu0 0
        %1708 = vmatprep.subr.bf16.mxu0 0
        %1709 = vmatpush1.bf16.msra.mxu0 0
        %1710 = vmatprep.subr.bf16.mxu0 0
        %1711 = vmatpush1.bf16.msra.mxu0 0
        %1712 = vmatprep.mubr.bf16.mxu0 0
        %1713 = vmatmul.mubr.bf16.gmra.mrb[0].mxu0 %v1675
        %v1714 = vpop.f32.mrb[0].mxu0
        %v1715 = vadd.f32 0.0, %v1714
        %v1716 = vpop.f32.mrb[0].mxu0
        %v1717 = vpop.f32.mrb[0].mxu0
        %v1718 = vpop.f32.mrb[0].mxu0
        %1719 = vdwg.mxu0
        %v1721 = vsel %vm1202, %v1622, 0
        %v1724 = vsel %vm1438, %v1626, 0
        %1726 = vmatprep.subr.bf16.mxu0 0
        %1727 = vmatpush1.bf16.msra.mxu0 %v1724
        %1728 = vmatprep.subr.bf16.mxu0 0
        %1729 = vmatpush1.bf16.msra.mxu0 0
        %1730 = vmatprep.subr.bf16.mxu0 0
        %1731 = vmatpush1.bf16.msra.mxu0 0
        %1732 = vmatprep.subr.bf16.mxu0 0
        %1733 = vmatpush1.bf16.msra.mxu0 0
        %1734 = vmatprep.subr.bf16.mxu0 0
        %1735 = vmatpush1.bf16.msra.mxu0 0
        %1736 = vmatprep.subr.bf16.mxu0 0
        %1737 = vmatpush1.bf16.msra.mxu0 0
        %1738 = vmatprep.subr.bf16.mxu0 0
        %1739 = vmatpush1.bf16.msra.mxu0 0
        %1740 = vmatprep.subr.bf16.mxu0 0
        %1741 = vmatpush1.bf16.msra.mxu0 0
        %1742 = vmatprep.subr.bf16.mxu0 0
        %1743 = vmatpush1.bf16.msra.mxu0 0
        %1744 = vmatprep.subr.bf16.mxu0 0
        %1745 = vmatpush1.bf16.msra.mxu0 0
        %1746 = vmatprep.subr.bf16.mxu0 0
        %1747 = vmatpush1.bf16.msra.mxu0 0
        %1748 = vmatprep.subr.bf16.mxu0 0
        %1749 = vmatpush1.bf16.msra.mxu0 0
        %1750 = vmatprep.subr.bf16.mxu0 0
        %1751 = vmatpush1.bf16.msra.mxu0 0
        %1752 = vmatprep.subr.bf16.mxu0 0
        %1753 = vmatpush1.bf16.msra.mxu0 0
        %1754 = vmatprep.subr.bf16.mxu0 0
        %1755 = vmatpush1.bf16.msra.mxu0 0
        %1756 = vmatprep.subr.bf16.mxu0 0
        %1757 = vmatpush1.bf16.msra.mxu0 0
        %1758 = vmatprep.mubr.bf16.mxu0 0
        %1759 = vmatmul.mubr.bf16.gmra.mrb[0].mxu0 %v1721
        %v1760 = vpop.f32.mrb[0].mxu0
        %v1761 = vadd.f32 0.0, %v1760
        %v1762 = vpop.f32.mrb[0].mxu0
        %v1763 = vpop.f32.mrb[0].mxu0
        %v1764 = vpop.f32.mrb[0].mxu0
        %1765 = vdwg.mxu0
        %v1767 = vsel %vm1202, %v1623, 0
        %v1770 = vsel %vm1438, %v1627, 0
        %1772 = vmatprep.subr.bf16.mxu0 0
        %1773 = vmatpush1.bf16.msra.mxu0 %v1770
        %1774 = vmatprep.subr.bf16.mxu0 0
        %1775 = vmatpush1.bf16.msra.mxu0 0
        %1776 = vmatprep.subr.bf16.mxu0 0
        %1777 = vmatpush1.bf16.msra.mxu0 0
        %1778 = vmatprep.subr.bf16.mxu0 0
        %1779 = vmatpush1.bf16.msra.mxu0 0
        %1780 = vmatprep.subr.bf16.mxu0 0
        %1781 = vmatpush1.bf16.msra.mxu0 0
        %1782 = vmatprep.subr.bf16.mxu0 0
        %1783 = vmatpush1.bf16.msra.mxu0 0
        %1784 = vmatprep.subr.bf16.mxu0 0
        %1785 = vmatpush1.bf16.msra.mxu0 0
        %1786 = vmatprep.subr.bf16.mxu0 0
        %1787 = vmatpush1.bf16.msra.mxu0 0
        %1788 = vmatprep.subr.bf16.mxu0 0
        %1789 = vmatpush1.bf16.msra.mxu0 0
        %1790 = vmatprep.subr.bf16.mxu0 0
        %1791 = vmatpush1.bf16.msra.mxu0 0
        %1792 = vmatprep.subr.bf16.mxu0 0
        %1793 = vmatpush1.bf16.msra.mxu0 0
        %1794 = vmatprep.subr.bf16.mxu0 0
        %1795 = vmatpush1.bf16.msra.mxu0 0
        %1796 = vmatprep.subr.bf16.mxu0 0
        %1797 = vmatpush1.bf16.msra.mxu0 0
        %1798 = vmatprep.subr.bf16.mxu0 0
        %1799 = vmatpush1.bf16.msra.mxu0 0
        %1800 = vmatprep.subr.bf16.mxu0 0
        %1801 = vmatpush1.bf16.msra.mxu0 0
        %1802 = vmatprep.subr.bf16.mxu0 0
        %1803 = vmatpush1.bf16.msra.mxu0 0
        %1804 = vmatprep.mubr.bf16.mxu0 0
        %1805 = vmatmul.mubr.bf16.gmra.mrb[0].mxu0 %v1767
        %v1806 = vpop.f32.mrb[0].mxu0
        %v1807 = vadd.f32 0.0, %v1806
        %v1808 = vpop.f32.mrb[0].mxu0
        %v1809 = vpop.f32.mrb[0].mxu0
        %v1810 = vpop.f32.mrb[0].mxu0
        %1811 = vdwg.mxu0
        %v1812 = vld [vmem:[%s10] sm:$0x1]
        %v1814 = vlaneseq
        %v1815 = vshrl.u32 %v1814, 7
        %v1816 = vsub.s32 0, %v1815
        %v1817 = vrot.slane %v1812, %v1816
        %v1819 = vadd.f32 %v1669, %v1817
        %v1820 = vadd.f32 %v1819, %v1715
        %v1821 = vadd.f32 %v1820, %v1761
        %v1822 = vadd.f32 %v1821, %v1807
        %1823 = vst.msk [vmem:[%s403] sm:$0xff] %vm474, %v1822
        %s1824 = sand.u32 %s279, 1
        %s1825 = scalar_lea.sflag [#allocation3], %s1824
        %s1826 = sand.u32 %s279, 1
        %s1827 = smul.addr %s1826, 8
        %s1828 = scalar_lea.vmem [#allocation2], %s1827
        // Predicated region
        $region65: #{tpu_custom_call.1} parent=63 // pred_check
          %p1829 = pneg %p289
        $region66: #{tpu_custom_call.1} parent=63 // pred_check_branch
          %1831 = sbr.rel (%p1829) target = $region68
        $region67: #{tpu_custom_call.1} parent=63 // pred_region
          %s1833 = ssub.s32 128, 128
          %1834 = vsyncadd %s1825, %s1833
          %s1835 = smul.addr %s25, 128
          %s1836 = scalar_lea.hbm %s11, %s1835
          %s1838 = sshll.u32 %s1828, 4
          %s1839 = int_to_ptr.vmem [resolvable:$true] %s1838
          %1841 = dma.vmem_to_hbm [thread:$0]  %s1839, 128, %s1836, %s1825
        $region68: #{tpu_custom_call.1} parent=63 // pred_fallthru
          _
      $region64: #{tpu_custom_call.1} parent=5 // pred_fallthru
        _
      %p1842 = scmp.le.s32.totalorder 2, %s20
      // Predicated region
      $region69: #{tpu_custom_call.1} parent=5 // pred_check
        %p1843 = pneg %p1842
      $region70: #{tpu_custom_call.1} parent=5 // pred_check_branch
        %1845 = sbr.rel (%p1843) target = $region72
      $region71: #{tpu_custom_call.1} parent=5 // pred_region
        %s1846 = ssub.s32 %s20, 2
        // Predicated region
        $region73: #{tpu_custom_call.1} parent=71 // pred_check
          %p1847 = pneg %p295
        $region74: #{tpu_custom_call.1} parent=71 // pred_check_branch
          %1849 = sbr.rel (%p1847) target = $region76
        $region75: #{tpu_custom_call.1} parent=71 // pred_region
          %s1850 = sand.u32 %s280, 1
          %s1851 = scalar_lea.sflag [#allocation3], %s1850
          %s1852 = sand.u32 %s280, 1
          %s1853 = smul.addr %s1852, 8
          %s1854 = scalar_lea.vmem [#allocation2], %s1853
          %1855 = dma.done %s1851, 128
        $region76: #{tpu_custom_call.1} parent=71 // pred_fallthru
          _
      $region72: #{tpu_custom_call.1} parent=5 // pred_fallthru
        _
    $region6: #{tpu_custom_call.1} parent=1 // loop_footer
      %s24 = sadd.s32 1, %s20
    $region7: #{tpu_custom_call.1} parent=1 // loop_footer_branch
      %19 = sbr.rel target = $region3
    $region8: #{tpu_custom_call.1} parent=1 // loop_exit
      _
    %1856 = vsyncpa [#allocation3], 1
    %s1857 = scalar_lea.sflag [#allocation3], 1
    %1858 = vsyncpa %s1857, 1

</llo_original>
